<compile_context>
chip_gen: v7x
topology: tpu7x:2x2x1
jax: 0.10.0
libtpu: 0.0.40
codegen_flags: <defaults>
</compile_context>

<pallas_src>
import functools

import numpy as np
import jax
import jax.numpy as jnp
from jax import lax
from jax.experimental import pallas as pl
from jax.experimental.pallas import tpu as pltpu

IMAGE_SIZE = (1, 28, 28)
IN_DIM = int(np.prod(IMAGE_SIZE))            # 784
DIMS = [IN_DIM, 512, 256, 128, 64, 32, 1]    # true layer widths

_LANE = 128
_SUBLANE_BF16 = 16                           # bf16 sublane tile height


def _round_up(x, m):
    return ((x + m - 1) // m) * m


# Lane-padded widths: [896, 512, 256, 128, 128, 128, 128]
PDIMS = [_round_up(d, _LANE) for d in DIMS]
OUT_PAD = PDIMS[-1]                          # 128; real logit lives in column 0

_SQRT_HALF = 0.7071067811865476


def _gelu_exact(x):
    # torch.nn.GELU(approximate='none') == 0.5 * x * (1 + erf(x / sqrt(2)))
    return 0.5 * x * (1.0 + lax.erf(x * _SQRT_HALF))


def _supports_bf16_vpu():
    """bf16 elementwise math only pays off where the VPU has a bf16 path
    (v6e / v7x). v5e/v5p/v4 and older: keep GELU in f32."""
    try:
        kind = jax.devices()[0].device_kind.lower()
    except Exception:
        return True
    return not any(tag in kind for tag in ("v2", "v3", "v4", "v5"))


def _disc_kernel(x_ref,
                 w1_ref, b1_ref, w2_ref, b2_ref, w3_ref, b3_ref,
                 w4_ref, b4_ref, w5_ref, b5_ref, w6_ref, b6_ref,
                 o_ref, *, act_dtype):
    """One batch tile of the full MLP.

    bf16 matmuls with f32 accumulation; GELU in `act_dtype` (bf16 on v6e/v7x,
    f32 on v5e); sigmoid in f32.  All parameters are fully VMEM-resident via
    constant index maps."""

    def linear(h_bf16, w_ref, b_ref):
        # h is already bf16 (MXU input dtype); accumulate + bias-add in f32.
        return (jnp.dot(h_bf16, w_ref[...], preferred_element_type=jnp.float32)
                + b_ref[...])

    def act(h_f32):
        g = _gelu_exact(h_f32.astype(act_dtype))
        return g.astype(jnp.bfloat16)        # next matmul's input dtype

    h = act(linear(x_ref[...], w1_ref, b1_ref))      # x_ref is bf16: no cast
    h = act(linear(h, w2_ref, b2_ref))
    h = act(linear(h, w3_ref, b3_ref))
    h = act(linear(h, w4_ref, b4_ref))
    h = act(linear(h, w5_ref, b5_ref))
    logits = linear(h, w6_ref, b6_ref)               # f32 [blk, 128]

    # Numerically-stable sigmoid: exp and reciprocal both run on the EUP.
    z = jnp.exp(-jnp.abs(logits))
    r = pl.reciprocal(1.0 + z, approx=True)
    o_ref[...] = jnp.where(logits >= 0, r, z * r).astype(o_ref.dtype)


def _pad_2d(a, rows, cols):
    r, c = a.shape
    return jnp.pad(a, ((0, rows - r), (0, cols - c)))


def discriminator_forward(image, params, *, block_b=512):
    """image: [B, 1, 28, 28] (NCHW, like the PyTorch module).
    params: (weights, biases), f32, weights stored (in, out)."""
    B = image.shape[0]
    x = image.reshape(B, -1).astype(jnp.float32)
    assert x.shape[1] == IN_DIM

    # Batch tiling: tiles are multiples of 16 rows (bf16 sublane packing) and,
    # whenever the batch can be split into two >=16-row tiles, we force
    # grid >= 2 so both v7x TensorCores get work.
    n_tiles = max(1, -(-B // block_b))
    if B > _SUBLANE_BF16:
        n_tiles = max(n_tiles, 2)
    blk = _round_up(-(-B // n_tiles), _SUBLANE_BF16)
    padded_b = _round_up(B, blk)

    # Pad batch rows + lane-pad 784 -> 896 feature columns (guaranteed zeros
    # in the padded lanes), cast to bf16 (halves the HBM->VMEM DMA).
    x = jnp.pad(x, ((0, padded_b - B), (0, PDIMS[0] - IN_DIM)))
    x = x.astype(jnp.bfloat16)

    weights, biases = params
    flat_params, param_specs = [], []
    for li, (w, b) in enumerate(zip(weights, biases)):
        wp = _pad_2d(w.astype(jnp.float32), PDIMS[li], PDIMS[li + 1])
        wp = wp.astype(jnp.bfloat16)
        bp = _pad_2d(b.astype(jnp.float32).reshape(1, -1), 1, PDIMS[li + 1])
        flat_params += [wp, bp]
        param_specs += [pl.BlockSpec(wp.shape, lambda i: (0, 0)),
                        pl.BlockSpec(bp.shape, lambda i: (0, 0))]

    grid = (padded_b // blk,)
    x_spec = pl.BlockSpec((blk, PDIMS[0]), lambda i: (i, 0))
    out_spec = pl.BlockSpec((blk, OUT_PAD), lambda i: (i, 0))

    act_dtype = jnp.bfloat16 if _supports_bf16_vpu() else jnp.float32
    kernel = functools.partial(_disc_kernel, act_dtype=act_dtype)

    flops = 2 * padded_b * sum(PDIMS[i] * PDIMS[i + 1] for i in range(6))
    transcendentals = padded_b * (sum(PDIMS[1:6]) + 2 * OUT_PAD)
    bytes_accessed = (padded_b * PDIMS[0] * 2                     # bf16 input
                      + sum(int(np.prod(p.shape)) * p.dtype.itemsize
                            for p in flat_params)                 # params
                      + padded_b * OUT_PAD * 2)                   # bf16 output

    compiler_kwargs = dict(dimension_semantics=("parallel",))
    if blk >= 512:
        # Real footprint at blk=1024 is ~10-12 MiB; 32 MiB gives headroom on
        # v5e's 16 MiB default scoped VMEM without starving v7x (64 MiB phys).
        compiler_kwargs["vmem_limit_bytes"] = 32 << 20

    out = pl.pallas_call(
        kernel,
        out_shape=jax.ShapeDtypeStruct((padded_b, OUT_PAD), jnp.bfloat16),
        grid_spec=pltpu.PrefetchScalarGridSpec(
            num_scalar_prefetch=0,
            grid=grid,
            in_specs=[x_spec] + param_specs,
            out_specs=out_spec,
        ),
        compiler_params=pltpu.CompilerParams(**compiler_kwargs),
        cost_estimate=pl.CostEstimate(
            flops=int(flops),
            transcendentals=int(transcendentals),
            bytes_accessed=int(bytes_accessed)),
    )(x, *flat_params)

    # Drop batch padding + the 127 zero-weight output columns; return f32 probs.
    return out[:B, :1].astype(jnp.float32)


def init_params(key):
    """Deterministic synthetic weights matching nn.Linear shapes.

    Stored as (in, out) so the kernel does x @ W + b directly (equivalent to
    PyTorch's x @ W.T with W of shape (out, in))."""
    weights, biases = [], []
    for i in range(len(DIMS) - 1):
        fan_in, fan_out = DIMS[i], DIMS[i + 1]
        key, kw, kb = jax.random.split(key, 3)
        bound = 1.0 / np.sqrt(fan_in)
        w = jax.random.uniform(kw, (fan_in, fan_out), jnp.float32,
                               -bound, bound)
        b = jax.random.uniform(kb, (1, fan_out), jnp.float32, -bound, bound)
        weights.append(w)
        biases.append(b)
    return weights, biases


def _ref_forward(img, params):
    """Pure-JAX f32 reference of the same math (torch-exact GELU + sigmoid)."""
    h = img.reshape(img.shape[0], -1).astype(jnp.float32)
    ws, bs = params
    for i in range(5):
        h = _gelu_exact(h @ ws[i] + bs[i])
    return jax.nn.sigmoid(h @ ws[5] + bs[5])


if __name__ == "__main__":
    key = jax.random.PRNGKey(0)
    key, k_img1, k_img2 = jax.random.split(key, 3)
    params = init_params(key)

    # Small batch: single grid step (blk == padded batch == 16).
    batch = 8
    image = jax.random.normal(k_img1, (batch, *IMAGE_SIZE), jnp.float32)
    prob = jax.block_until_ready(discriminator_forward(image, params))
    ref = _ref_forward(image, params)
    assert prob.shape == (batch, 1)
    # bf16 matmul/GELU path -> looser tolerance than the f32 reference.
    np.testing.assert_allclose(np.asarray(prob), np.asarray(ref),
                               rtol=5e-2, atol=4e-2)

    # Larger, non-multiple batch: exercises batch padding + multi-step grid
    # (n_tiles=3, blk=112 with block_b=128).
    batch2 = 300
    image2 = jax.random.normal(k_img2, (batch2, *IMAGE_SIZE), jnp.float32)
    prob2 = jax.block_until_ready(
        discriminator_forward(image2, params, block_b=128))
    ref2 = _ref_forward(image2, params)
    assert prob2.shape == (batch2, 1)
    np.testing.assert_allclose(np.asarray(prob2), np.asarray(ref2),
                               rtol=5e-2, atol=4e-2)

    print("KERNEL_OK")
</pallas_src>

<mosaic_0001>
module attributes {stable_mosaic.version = 11 : i64} {
  func.func @_disc_kernel(%arg0: i32, %arg1: memref<16x896xbf16, #tpu.memory_space<vmem>>, %arg2: memref<896x512xbf16, #tpu.memory_space<vmem>>, %arg3: memref<1x512xf32, #tpu.memory_space<vmem>>, %arg4: memref<512x256xbf16, #tpu.memory_space<vmem>>, %arg5: memref<1x256xf32, #tpu.memory_space<vmem>>, %arg6: memref<256x128xbf16, #tpu.memory_space<vmem>>, %arg7: memref<1x128xf32, #tpu.memory_space<vmem>>, %arg8: memref<128x128xbf16, #tpu.memory_space<vmem>>, %arg9: memref<1x128xf32, #tpu.memory_space<vmem>>, %arg10: memref<128x128xbf16, #tpu.memory_space<vmem>>, %arg11: memref<1x128xf32, #tpu.memory_space<vmem>>, %arg12: memref<128x128xbf16, #tpu.memory_space<vmem>>, %arg13: memref<1x128xf32, #tpu.memory_space<vmem>>, %arg14: memref<16x128xbf16, #tpu.memory_space<vmem>>) attributes {dimension_semantics = [#tpu.dimension_semantics<parallel>], iteration_bounds = array<i64: 1>, scalar_prefetch = 0 : i64, scratch_operands = 0 : i64, tpu.core_type = #tpu.core_type<tc>, window_params = [{transform_indices = @transform_0, window_bounds = array<i64: 16, 896>}, {pipeline_mode = #tpu.pipeline_mode<synchronous>, transform_indices = @transform_1, window_bounds = array<i64: 896, 512>}, {pipeline_mode = #tpu.pipeline_mode<synchronous>, transform_indices = @transform_2, window_bounds = array<i64: 1, 512>}, {pipeline_mode = #tpu.pipeline_mode<synchronous>, transform_indices = @transform_3, window_bounds = array<i64: 512, 256>}, {pipeline_mode = #tpu.pipeline_mode<synchronous>, transform_indices = @transform_4, window_bounds = array<i64: 1, 256>}, {pipeline_mode = #tpu.pipeline_mode<synchronous>, transform_indices = @transform_5, window_bounds = array<i64: 256, 128>}, {pipeline_mode = #tpu.pipeline_mode<synchronous>, transform_indices = @transform_6, window_bounds = array<i64: 1, 128>}, {pipeline_mode = #tpu.pipeline_mode<synchronous>, transform_indices = @transform_7, window_bounds = array<i64: 128, 128>}, {pipeline_mode = #tpu.pipeline_mode<synchronous>, transform_indices = @transform_8, window_bounds = array<i64: 1, 128>}, {pipeline_mode = #tpu.pipeline_mode<synchronous>, transform_indices = @transform_9, window_bounds = array<i64: 128, 128>}, {pipeline_mode = #tpu.pipeline_mode<synchronous>, transform_indices = @transform_10, window_bounds = array<i64: 1, 128>}, {pipeline_mode = #tpu.pipeline_mode<synchronous>, transform_indices = @transform_11, window_bounds = array<i64: 128, 128>}, {pipeline_mode = #tpu.pipeline_mode<synchronous>, transform_indices = @transform_12, window_bounds = array<i64: 1, 128>}, {transform_indices = @transform_13, window_bounds = array<i64: 16, 128>}]} {
    %c0 = arith.constant 0 : index
    %c0_0 = arith.constant 0 : index
    %0 = vector.load %arg1[%c0, %c0_0] : memref<16x896xbf16, #tpu.memory_space<vmem>>, vector<16x896xbf16>
    %c0_1 = arith.constant 0 : index
    %c0_2 = arith.constant 0 : index
    %1 = vector.load %arg2[%c0_1, %c0_2] : memref<896x512xbf16, #tpu.memory_space<vmem>>, vector<896x512xbf16>
    %cst = arith.constant dense<0.000000e+00> : vector<16x512xf32>
    %2 = tpu.matmul %0, %1, %cst {dimension_numbers = #tpu.dot_dimension_numbers<[1], [0], [0], [1], [0, 0, 1, 1], [], []>} : vector<16x896xbf16>, vector<896x512xbf16>, vector<16x512xf32> -> vector<16x512xf32>
    %c0_3 = arith.constant 0 : index
    %c0_4 = arith.constant 0 : index
    %3 = vector.load %arg3[%c0_3, %c0_4] : memref<1x512xf32, #tpu.memory_space<vmem>>, vector<1x512xf32>
    %4 = vector.broadcast %3 : vector<1x512xf32> to vector<16x512xf32>
    %5 = arith.addf %2, %4 : vector<16x512xf32>
    %6 = arith.truncf %5 : vector<16x512xf32> to vector<16x512xbf16>
    %cst_5 = arith.constant 5.000000e-01 : bf16
    %7 = vector.broadcast %cst_5 : bf16 to vector<16x512xbf16>
    %8 = arith.mulf %7, %6 : vector<16x512xbf16>
    %cst_6 = arith.constant 7.070310e-01 : bf16
    %9 = vector.broadcast %cst_6 : bf16 to vector<16x512xbf16>
    %10 = arith.mulf %6, %9 : vector<16x512xbf16>
    %11 = math.erf %10 : vector<16x512xbf16>
    %cst_7 = arith.constant 1.000000e+00 : bf16
    %12 = vector.broadcast %cst_7 : bf16 to vector<16x512xbf16>
    %13 = arith.addf %12, %11 : vector<16x512xbf16>
    %14 = arith.mulf %8, %13 : vector<16x512xbf16>
    %c0_8 = arith.constant 0 : index
    %c0_9 = arith.constant 0 : index
    %15 = vector.load %arg4[%c0_8, %c0_9] : memref<512x256xbf16, #tpu.memory_space<vmem>>, vector<512x256xbf16>
    %cst_10 = arith.constant dense<0.000000e+00> : vector<16x256xf32>
    %16 = tpu.matmul %14, %15, %cst_10 {dimension_numbers = #tpu.dot_dimension_numbers<[1], [0], [0], [1], [0, 0, 1, 1], [], []>} : vector<16x512xbf16>, vector<512x256xbf16>, vector<16x256xf32> -> vector<16x256xf32>
    %c0_11 = arith.constant 0 : index
    %c0_12 = arith.constant 0 : index
    %17 = vector.load %arg5[%c0_11, %c0_12] : memref<1x256xf32, #tpu.memory_space<vmem>>, vector<1x256xf32>
    %18 = vector.broadcast %17 : vector<1x256xf32> to vector<16x256xf32>
    %19 = arith.addf %16, %18 : vector<16x256xf32>
    %20 = arith.truncf %19 : vector<16x256xf32> to vector<16x256xbf16>
    %cst_13 = arith.constant 5.000000e-01 : bf16
    %21 = vector.broadcast %cst_13 : bf16 to vector<16x256xbf16>
    %22 = arith.mulf %21, %20 : vector<16x256xbf16>
    %cst_14 = arith.constant 7.070310e-01 : bf16
    %23 = vector.broadcast %cst_14 : bf16 to vector<16x256xbf16>
    %24 = arith.mulf %20, %23 : vector<16x256xbf16>
    %25 = math.erf %24 : vector<16x256xbf16>
    %cst_15 = arith.constant 1.000000e+00 : bf16
    %26 = vector.broadcast %cst_15 : bf16 to vector<16x256xbf16>
    %27 = arith.addf %26, %25 : vector<16x256xbf16>
    %28 = arith.mulf %22, %27 : vector<16x256xbf16>
    %c0_16 = arith.constant 0 : index
    %c0_17 = arith.constant 0 : index
    %29 = vector.load %arg6[%c0_16, %c0_17] : memref<256x128xbf16, #tpu.memory_space<vmem>>, vector<256x128xbf16>
    %cst_18 = arith.constant dense<0.000000e+00> : vector<16x128xf32>
    %30 = tpu.matmul %28, %29, %cst_18 {dimension_numbers = #tpu.dot_dimension_numbers<[1], [0], [0], [1], [0, 0, 1, 1], [], []>} : vector<16x256xbf16>, vector<256x128xbf16>, vector<16x128xf32> -> vector<16x128xf32>
    %c0_19 = arith.constant 0 : index
    %c0_20 = arith.constant 0 : index
    %31 = vector.load %arg7[%c0_19, %c0_20] : memref<1x128xf32, #tpu.memory_space<vmem>>, vector<1x128xf32>
    %32 = vector.broadcast %31 : vector<1x128xf32> to vector<16x128xf32>
    %33 = arith.addf %30, %32 : vector<16x128xf32>
    %34 = arith.truncf %33 : vector<16x128xf32> to vector<16x128xbf16>
    %cst_21 = arith.constant 5.000000e-01 : bf16
    %35 = vector.broadcast %cst_21 : bf16 to vector<16x128xbf16>
    %36 = arith.mulf %35, %34 : vector<16x128xbf16>
    %cst_22 = arith.constant 7.070310e-01 : bf16
    %37 = vector.broadcast %cst_22 : bf16 to vector<16x128xbf16>
    %38 = arith.mulf %34, %37 : vector<16x128xbf16>
    %39 = math.erf %38 : vector<16x128xbf16>
    %cst_23 = arith.constant 1.000000e+00 : bf16
    %40 = vector.broadcast %cst_23 : bf16 to vector<16x128xbf16>
    %41 = arith.addf %40, %39 : vector<16x128xbf16>
    %42 = arith.mulf %36, %41 : vector<16x128xbf16>
    %c0_24 = arith.constant 0 : index
    %c0_25 = arith.constant 0 : index
    %43 = vector.load %arg8[%c0_24, %c0_25] : memref<128x128xbf16, #tpu.memory_space<vmem>>, vector<128x128xbf16>
    %cst_26 = arith.constant dense<0.000000e+00> : vector<16x128xf32>
    %44 = tpu.matmul %42, %43, %cst_26 {dimension_numbers = #tpu.dot_dimension_numbers<[1], [0], [0], [1], [0, 0, 1, 1], [], []>} : vector<16x128xbf16>, vector<128x128xbf16>, vector<16x128xf32> -> vector<16x128xf32>
    %c0_27 = arith.constant 0 : index
    %c0_28 = arith.constant 0 : index
    %45 = vector.load %arg9[%c0_27, %c0_28] : memref<1x128xf32, #tpu.memory_space<vmem>>, vector<1x128xf32>
    %46 = vector.broadcast %45 : vector<1x128xf32> to vector<16x128xf32>
    %47 = arith.addf %44, %46 : vector<16x128xf32>
    %48 = arith.truncf %47 : vector<16x128xf32> to vector<16x128xbf16>
    %cst_29 = arith.constant 5.000000e-01 : bf16
    %49 = vector.broadcast %cst_29 : bf16 to vector<16x128xbf16>
    %50 = arith.mulf %49, %48 : vector<16x128xbf16>
    %cst_30 = arith.constant 7.070310e-01 : bf16
    %51 = vector.broadcast %cst_30 : bf16 to vector<16x128xbf16>
    %52 = arith.mulf %48, %51 : vector<16x128xbf16>
    %53 = math.erf %52 : vector<16x128xbf16>
    %cst_31 = arith.constant 1.000000e+00 : bf16
    %54 = vector.broadcast %cst_31 : bf16 to vector<16x128xbf16>
    %55 = arith.addf %54, %53 : vector<16x128xbf16>
    %56 = arith.mulf %50, %55 : vector<16x128xbf16>
    %c0_32 = arith.constant 0 : index
    %c0_33 = arith.constant 0 : index
    %57 = vector.load %arg10[%c0_32, %c0_33] : memref<128x128xbf16, #tpu.memory_space<vmem>>, vector<128x128xbf16>
    %cst_34 = arith.constant dense<0.000000e+00> : vector<16x128xf32>
    %58 = tpu.matmul %56, %57, %cst_34 {dimension_numbers = #tpu.dot_dimension_numbers<[1], [0], [0], [1], [0, 0, 1, 1], [], []>} : vector<16x128xbf16>, vector<128x128xbf16>, vector<16x128xf32> -> vector<16x128xf32>
    %c0_35 = arith.constant 0 : index
    %c0_36 = arith.constant 0 : index
    %59 = vector.load %arg11[%c0_35, %c0_36] : memref<1x128xf32, #tpu.memory_space<vmem>>, vector<1x128xf32>
    %60 = vector.broadcast %59 : vector<1x128xf32> to vector<16x128xf32>
    %61 = arith.addf %58, %60 : vector<16x128xf32>
    %62 = arith.truncf %61 : vector<16x128xf32> to vector<16x128xbf16>
    %cst_37 = arith.constant 5.000000e-01 : bf16
    %63 = vector.broadcast %cst_37 : bf16 to vector<16x128xbf16>
    %64 = arith.mulf %63, %62 : vector<16x128xbf16>
    %cst_38 = arith.constant 7.070310e-01 : bf16
    %65 = vector.broadcast %cst_38 : bf16 to vector<16x128xbf16>
    %66 = arith.mulf %62, %65 : vector<16x128xbf16>
    %67 = math.erf %66 : vector<16x128xbf16>
    %cst_39 = arith.constant 1.000000e+00 : bf16
    %68 = vector.broadcast %cst_39 : bf16 to vector<16x128xbf16>
    %69 = arith.addf %68, %67 : vector<16x128xbf16>
    %70 = arith.mulf %64, %69 : vector<16x128xbf16>
    %c0_40 = arith.constant 0 : index
    %c0_41 = arith.constant 0 : index
    %71 = vector.load %arg12[%c0_40, %c0_41] : memref<128x128xbf16, #tpu.memory_space<vmem>>, vector<128x128xbf16>
    %cst_42 = arith.constant dense<0.000000e+00> : vector<16x128xf32>
    %72 = tpu.matmul %70, %71, %cst_42 {dimension_numbers = #tpu.dot_dimension_numbers<[1], [0], [0], [1], [0, 0, 1, 1], [], []>} : vector<16x128xbf16>, vector<128x128xbf16>, vector<16x128xf32> -> vector<16x128xf32>
    %c0_43 = arith.constant 0 : index
    %c0_44 = arith.constant 0 : index
    %73 = vector.load %arg13[%c0_43, %c0_44] : memref<1x128xf32, #tpu.memory_space<vmem>>, vector<1x128xf32>
    %74 = vector.broadcast %73 : vector<1x128xf32> to vector<16x128xf32>
    %75 = arith.addf %72, %74 : vector<16x128xf32>
    %76 = math.absf %75 : vector<16x128xf32>
    %cst_45 = arith.constant 0.000000e+00 : f32
    %77 = vector.broadcast %cst_45 : f32 to vector<16x128xf32>
    %78 = arith.subf %77, %76 : vector<16x128xf32>
    %79 = math.exp %78 : vector<16x128xf32>
    %cst_46 = arith.constant 1.000000e+00 : f32
    %80 = vector.broadcast %cst_46 : f32 to vector<16x128xf32>
    %81 = arith.addf %80, %79 : vector<16x128xf32>
    %82 = tpu.reciprocal %81 {approx = true} : vector<16x128xf32> -> vector<16x128xf32>
    %cst_47 = arith.constant 0.000000e+00 : f32
    %83 = vector.broadcast %cst_47 : f32 to vector<16x128xf32>
    %84 = arith.cmpf oge, %75, %83 : vector<16x128xf32>
    %85 = arith.mulf %79, %82 : vector<16x128xf32>
    %86 = arith.select %84, %82, %85 : vector<16x128xi1>, vector<16x128xf32>
    %87 = arith.truncf %86 : vector<16x128xf32> to vector<16x128xbf16>
    %c0_48 = arith.constant 0 : index
    %c0_49 = arith.constant 0 : index
    %88 = vector.load %arg14[%c0_48, %c0_49] : memref<16x128xbf16, #tpu.memory_space<vmem>>, vector<16x128xbf16>
    tpu.vector_store %arg14[%c0_48, %c0_49], %87 {strides = array<i32>} : memref<16x128xbf16, #tpu.memory_space<vmem>>, vector<16x128xbf16>,
    return
  }
  func.func @transform_0(%arg0: i32) -> (i32, i32) {
    %c0_i32 = arith.constant 0 : i32
    %c0_i32_0 = arith.constant 0 : i32
    return %arg0, %c0_i32 : i32, i32
  }
  func.func @transform_1(%arg0: i32) -> (i32, i32) {
    %c0_i32 = arith.constant 0 : i32
    %c0_i32_0 = arith.constant 0 : i32
    %c0_i32_1 = arith.constant 0 : i32
    return %c0_i32, %c0_i32_0 : i32, i32
  }
  func.func @transform_2(%arg0: i32) -> (i32, i32) {
    %c0_i32 = arith.constant 0 : i32
    %c0_i32_0 = arith.constant 0 : i32
    %c0_i32_1 = arith.constant 0 : i32
    return %c0_i32, %c0_i32_0 : i32, i32
  }
  func.func @transform_3(%arg0: i32) -> (i32, i32) {
    %c0_i32 = arith.constant 0 : i32
    %c0_i32_0 = arith.constant 0 : i32
    %c0_i32_1 = arith.constant 0 : i32
    return %c0_i32, %c0_i32_0 : i32, i32
  }
  func.func @transform_4(%arg0: i32) -> (i32, i32) {
    %c0_i32 = arith.constant 0 : i32
    %c0_i32_0 = arith.constant 0 : i32
    %c0_i32_1 = arith.constant 0 : i32
    return %c0_i32, %c0_i32_0 : i32, i32
  }
  func.func @transform_5(%arg0: i32) -> (i32, i32) {
    %c0_i32 = arith.constant 0 : i32
    %c0_i32_0 = arith.constant 0 : i32
    %c0_i32_1 = arith.constant 0 : i32
    return %c0_i32, %c0_i32_0 : i32, i32
  }
  func.func @transform_6(%arg0: i32) -> (i32, i32) {
    %c0_i32 = arith.constant 0 : i32
    %c0_i32_0 = arith.constant 0 : i32
    %c0_i32_1 = arith.constant 0 : i32
    return %c0_i32, %c0_i32_0 : i32, i32
  }
  func.func @transform_7(%arg0: i32) -> (i32, i32) {
    %c0_i32 = arith.constant 0 : i32
    %c0_i32_0 = arith.constant 0 : i32
    %c0_i32_1 = arith.constant 0 : i32
    return %c0_i32, %c0_i32_0 : i32, i32
  }
  func.func @transform_8(%arg0: i32) -> (i32, i32) {
    %c0_i32 = arith.constant 0 : i32
    %c0_i32_0 = arith.constant 0 : i32
    %c0_i32_1 = arith.constant 0 : i32
    return %c0_i32, %c0_i32_0 : i32, i32
  }
  func.func @transform_9(%arg0: i32) -> (i32, i32) {
    %c0_i32 = arith.constant 0 : i32
    %c0_i32_0 = arith.constant 0 : i32
    %c0_i32_1 = arith.constant 0 : i32
    return %c0_i32, %c0_i32_0 : i32, i32
  }
  func.func @transform_10(%arg0: i32) -> (i32, i32) {
    %c0_i32 = arith.constant 0 : i32
    %c0_i32_0 = arith.constant 0 : i32
    %c0_i32_1 = arith.constant 0 : i32
    return %c0_i32, %c0_i32_0 : i32, i32
  }
  func.func @transform_11(%arg0: i32) -> (i32, i32) {
    %c0_i32 = arith.constant 0 : i32
    %c0_i32_0 = arith.constant 0 : i32
    %c0_i32_1 = arith.constant 0 : i32
    return %c0_i32, %c0_i32_0 : i32, i32
  }
  func.func @transform_12(%arg0: i32) -> (i32, i32) {
    %c0_i32 = arith.constant 0 : i32
    %c0_i32_0 = arith.constant 0 : i32
    %c0_i32_1 = arith.constant 0 : i32
    return %c0_i32, %c0_i32_0 : i32, i32
  }
  func.func @transform_13(%arg0: i32) -> (i32, i32) {
    %c0_i32 = arith.constant 0 : i32
    %c0_i32_0 = arith.constant 0 : i32
    return %arg0, %c0_i32 : i32, i32
  }
}

</mosaic_0001>

<llo_original>
// kernel: tpu_custom_call.1
$region0: #{tpu_custom_call.1}
  #allocation0 [shape = 'u32[]', space=smem, size = 0x4, offset = 0x4, fixed_abs, tag = 'smem constant byte address 0x4 - core index']
  #allocation1 [shape = 'u32[144,128]{1,0:T(1,128)}', space=vmem, size = 0x12000, scoped, tag = 'internal scratch']
  %s0 = inlined_call_operand.hbm [shape: bf16[16,896], index: 0, kind: input, shape index: {}]
  %s1 = inlined_call_operand.hbm [shape: bf16[896,512], index: 1, kind: input, shape index: {}]
  %s2 = inlined_call_operand.vmem [shape: f32[1,512], index: 2, kind: input, shape index: {}]
  %s3 = inlined_call_operand.hbm [shape: bf16[512,256], index: 3, kind: input, shape index: {}]
  %s4 = inlined_call_operand.vmem [shape: f32[1,256], index: 4, kind: input, shape index: {}]
  %s5 = inlined_call_operand.hbm [shape: bf16[256,128], index: 5, kind: input, shape index: {}]
  %s6 = inlined_call_operand.vmem [shape: f32[1,128], index: 6, kind: input, shape index: {}]
  %s7 = inlined_call_operand.hbm [shape: bf16[128,128], index: 7, kind: input, shape index: {}]
  %s8 = inlined_call_operand.vmem [shape: f32[1,128], index: 8, kind: input, shape index: {}]
  %s9 = inlined_call_operand.hbm [shape: bf16[128,128], index: 9, kind: input, shape index: {}]
  %s10 = inlined_call_operand.vmem [shape: f32[1,128], index: 10, kind: input, shape index: {}]
  %s11 = inlined_call_operand.hbm [shape: bf16[128,128], index: 11, kind: input, shape index: {}]
  %s12 = inlined_call_operand.vmem [shape: f32[1,128], index: 12, kind: input, shape index: {}]
  %s13 = inlined_call_operand.hbm [shape: bf16[16,128], index: 13, kind: output, shape index: {}]
  %s14 = sld [smem:[#allocation0]]
  $region90: #{tpu_custom_call.1} parent=0
    _
  %s16 = ssub.s32 1, %s14
  %s17 = scalar_select 0, %s16, %s14
  $region1: #{tpu_custom_call.1} parent=0
    #allocation2 [shape = 'u8[28672]{0}', space=vmem, size = 0x7000, scoped, tag = 'input window, operand 0, single buffered']
    #allocation3 [shape = 's32[1]{0}', space=sflag, size = 0x4, scoped, tag = 'scoped memory for tpu_custom_call.1']
    #allocation4 [shape = 's32[1]{0}', space=sflag, size = 0x4, scoped, tag = 'scoped memory for tpu_custom_call.1']
    #allocation5 [shape = 'u8[917504]{0}', space=vmem, size = 0xe0000, scoped, tag = 'input window, operand 1, single buffered']
    #allocation6 [shape = 's32[1]{0}', space=sflag, size = 0x4, scoped, tag = 'scoped memory for tpu_custom_call.1']
    #allocation7 [shape = 'u8[262144]{0}', space=vmem, size = 0x40000, scoped, tag = 'input window, operand 3, single buffered']
    #allocation8 [shape = 'u8[65536]{0}', space=vmem, size = 0x10000, scoped, tag = 'input window, operand 5, single buffered']
    #allocation9 [shape = 's32[1]{0}', space=sflag, size = 0x4, scoped, tag = 'scoped memory for tpu_custom_call.1']
    #allocation10 [shape = 'u8[32768]{0}', space=vmem, size = 0x8000, scoped, tag = 'input window, operand 7, single buffered']
    #allocation11 [shape = 'u8[32768]{0}', space=vmem, size = 0x8000, scoped, tag = 'input window, operand 9, single buffered']
    #allocation12 [shape = 's32[1]{0}', space=sflag, size = 0x4, scoped, tag = 'scoped memory for tpu_custom_call.1']
    #allocation13 [shape = 'u8[32768]{0}', space=vmem, size = 0x8000, scoped, tag = 'input window, operand 11, single buffered']
    #allocation14 [shape = 'u8[4096]{0}', space=vmem, size = 0x1000, scoped, tag = 'output window, operand 0, single buffered']
    %18 = vsyncpa [#allocation3], 0
    %19 = vsyncpa [#allocation6], 0
    %20 = vsyncpa [#allocation9], 0
    %21 = vsyncpa [#allocation12], 0
    %22 = vsyncpa [#allocation4], 0
    // Predicated region
    $region2: #{tpu_custom_call.1} parent=1 // pred_check
      _
    $region3: #{tpu_custom_call.1} parent=1 // pred_check_branch
      %24 = sbr.rel (0) target = $region5
    $region4: #{tpu_custom_call.1} parent=1 // pred_region
      %s26 = ssub.s32 896, 896
      %27 = vsyncadd [#allocation3], %s26
      %s28 = sshll.u32 [#allocation2], 4
      %s29 = int_to_ptr.vmem [resolvable:$true] %s28
      %34 = dma.hbm_to_vmem [thread:$0]  %s0, 896, %s29, [#allocation3], 448, 448, 28
    $region5: #{tpu_custom_call.1} parent=1 // pred_fallthru
      _
    // Predicated region
    $region6: #{tpu_custom_call.1} parent=1 // pred_check
      _
    $region7: #{tpu_custom_call.1} parent=1 // pred_check_branch
      %36 = sbr.rel (0) target = $region9
    $region8: #{tpu_custom_call.1} parent=1 // pred_region
      %s38 = ssub.s32 28672, 28672
      %39 = vsyncadd [#allocation6], %s38
      %s40 = sshll.u32 [#allocation5], 4
      %s41 = int_to_ptr.vmem [resolvable:$true] %s40
      %46 = dma.hbm_to_vmem [thread:$0]  %s1, 28672, %s41, [#allocation6], 256, 256, 16
    $region9: #{tpu_custom_call.1} parent=1 // pred_fallthru
      _
    // Predicated region
    $region10: #{tpu_custom_call.1} parent=1 // pred_check
      _
    $region11: #{tpu_custom_call.1} parent=1 // pred_check_branch
      %48 = sbr.rel (0) target = $region13
    $region12: #{tpu_custom_call.1} parent=1 // pred_region
      _
    $region13: #{tpu_custom_call.1} parent=1 // pred_fallthru
      _
    // Predicated region
    $region14: #{tpu_custom_call.1} parent=1 // pred_check
      _
    $region15: #{tpu_custom_call.1} parent=1 // pred_check_branch
      %50 = sbr.rel (0) target = $region17
    $region16: #{tpu_custom_call.1} parent=1 // pred_region
      %s52 = ssub.s32 8192, 8192
      %53 = vsyncadd [#allocation6], %s52
      %s54 = sshll.u32 [#allocation7], 4
      %s55 = int_to_ptr.vmem [resolvable:$true] %s54
      %60 = dma.hbm_to_vmem [thread:$0]  %s3, 8192, %s55, [#allocation6], 128, 128, 8
    $region17: #{tpu_custom_call.1} parent=1 // pred_fallthru
      _
    // Predicated region
    $region18: #{tpu_custom_call.1} parent=1 // pred_check
      _
    $region19: #{tpu_custom_call.1} parent=1 // pred_check_branch
      %62 = sbr.rel (0) target = $region21
    $region20: #{tpu_custom_call.1} parent=1 // pred_region
      _
    $region21: #{tpu_custom_call.1} parent=1 // pred_fallthru
      _
    // Predicated region
    $region22: #{tpu_custom_call.1} parent=1 // pred_check
      _
    $region23: #{tpu_custom_call.1} parent=1 // pred_check_branch
      %64 = sbr.rel (0) target = $region25
    $region24: #{tpu_custom_call.1} parent=1 // pred_region
      %s66 = ssub.s32 2048, 2048
      %67 = vsyncadd [#allocation9], %s66
      %s68 = sshll.u32 [#allocation8], 4
      %s69 = int_to_ptr.vmem [resolvable:$true] %s68
      %74 = dma.hbm_to_vmem [thread:$0]  %s5, 2048, %s69, [#allocation9], 64, 64, 4
    $region25: #{tpu_custom_call.1} parent=1 // pred_fallthru
      _
    // Predicated region
    $region26: #{tpu_custom_call.1} parent=1 // pred_check
      _
    $region27: #{tpu_custom_call.1} parent=1 // pred_check_branch
      %76 = sbr.rel (0) target = $region29
    $region28: #{tpu_custom_call.1} parent=1 // pred_region
      _
    $region29: #{tpu_custom_call.1} parent=1 // pred_fallthru
      _
    // Predicated region
    $region30: #{tpu_custom_call.1} parent=1 // pred_check
      _
    $region31: #{tpu_custom_call.1} parent=1 // pred_check_branch
      %78 = sbr.rel (0) target = $region33
    $region32: #{tpu_custom_call.1} parent=1 // pred_region
      %s80 = ssub.s32 1024, 1024
      %81 = vsyncadd [#allocation9], %s80
      %s82 = sshll.u32 [#allocation10], 4
      %s83 = int_to_ptr.vmem [resolvable:$true] %s82
      %88 = dma.hbm_to_vmem [thread:$0]  %s7, 1024, %s83, [#allocation9], 64, 64, 4
    $region33: #{tpu_custom_call.1} parent=1 // pred_fallthru
      _
    // Predicated region
    $region34: #{tpu_custom_call.1} parent=1 // pred_check
      _
    $region35: #{tpu_custom_call.1} parent=1 // pred_check_branch
      %90 = sbr.rel (0) target = $region37
    $region36: #{tpu_custom_call.1} parent=1 // pred_region
      _
    $region37: #{tpu_custom_call.1} parent=1 // pred_fallthru
      _
    // Predicated region
    $region38: #{tpu_custom_call.1} parent=1 // pred_check
      _
    $region39: #{tpu_custom_call.1} parent=1 // pred_check_branch
      %92 = sbr.rel (0) target = $region41
    $region40: #{tpu_custom_call.1} parent=1 // pred_region
      %s94 = ssub.s32 1024, 1024
      %95 = vsyncadd [#allocation12], %s94
      %s96 = sshll.u32 [#allocation11], 4
      %s97 = int_to_ptr.vmem [resolvable:$true] %s96
      %102 = dma.hbm_to_vmem [thread:$0]  %s9, 1024, %s97, [#allocation12], 64, 64, 4
    $region41: #{tpu_custom_call.1} parent=1 // pred_fallthru
      _
    // Predicated region
    $region42: #{tpu_custom_call.1} parent=1 // pred_check
      _
    $region43: #{tpu_custom_call.1} parent=1 // pred_check_branch
      %104 = sbr.rel (0) target = $region45
    $region44: #{tpu_custom_call.1} parent=1 // pred_region
      _
    $region45: #{tpu_custom_call.1} parent=1 // pred_fallthru
      _
    // Predicated region
    $region46: #{tpu_custom_call.1} parent=1 // pred_check
      _
    $region47: #{tpu_custom_call.1} parent=1 // pred_check_branch
      %106 = sbr.rel (0) target = $region49
    $region48: #{tpu_custom_call.1} parent=1 // pred_region
      %s108 = ssub.s32 1024, 1024
      %109 = vsyncadd [#allocation12], %s108
      %s110 = sshll.u32 [#allocation13], 4
      %s111 = int_to_ptr.vmem [resolvable:$true] %s110
      %116 = dma.hbm_to_vmem [thread:$0]  %s11, 1024, %s111, [#allocation12], 64, 64, 4
    $region49: #{tpu_custom_call.1} parent=1 // pred_fallthru
      _
    // Predicated region
    $region50: #{tpu_custom_call.1} parent=1 // pred_check
      _
    $region51: #{tpu_custom_call.1} parent=1 // pred_check_branch
      %118 = sbr.rel (0) target = $region53
    $region52: #{tpu_custom_call.1} parent=1 // pred_region
      _
    $region53: #{tpu_custom_call.1} parent=1 // pred_fallthru
      _
    // Predicated region
    $region54: #{tpu_custom_call.1} parent=1 // pred_check
      _
    $region55: #{tpu_custom_call.1} parent=1 // pred_check_branch
      %120 = sbr.rel (0) target = $region57
    $region56: #{tpu_custom_call.1} parent=1 // pred_region
      %121 = dma.done [#allocation3], 896
    $region57: #{tpu_custom_call.1} parent=1 // pred_fallthru
      _
    // Predicated region
    $region58: #{tpu_custom_call.1} parent=1 // pred_check
      _
    $region59: #{tpu_custom_call.1} parent=1 // pred_check_branch
      %123 = sbr.rel (0) target = $region61
    $region60: #{tpu_custom_call.1} parent=1 // pred_region
      %124 = dma.done [#allocation6], 28672
    $region61: #{tpu_custom_call.1} parent=1 // pred_fallthru
      _
    // Predicated region
    $region62: #{tpu_custom_call.1} parent=1 // pred_check
      _
    $region63: #{tpu_custom_call.1} parent=1 // pred_check_branch
      %126 = sbr.rel (0) target = $region65
    $region64: #{tpu_custom_call.1} parent=1 // pred_region
      %127 = dma.done [#allocation6], 8192
    $region65: #{tpu_custom_call.1} parent=1 // pred_fallthru
      _
    // Predicated region
    $region66: #{tpu_custom_call.1} parent=1 // pred_check
      _
    $region67: #{tpu_custom_call.1} parent=1 // pred_check_branch
      %129 = sbr.rel (0) target = $region69
    $region68: #{tpu_custom_call.1} parent=1 // pred_region
      %130 = dma.done [#allocation9], 2048
    $region69: #{tpu_custom_call.1} parent=1 // pred_fallthru
      _
    // Predicated region
    $region70: #{tpu_custom_call.1} parent=1 // pred_check
      _
    $region71: #{tpu_custom_call.1} parent=1 // pred_check_branch
      %132 = sbr.rel (0) target = $region73
    $region72: #{tpu_custom_call.1} parent=1 // pred_region
      %133 = dma.done [#allocation9], 1024
    $region73: #{tpu_custom_call.1} parent=1 // pred_fallthru
      _
    // Predicated region
    $region74: #{tpu_custom_call.1} parent=1 // pred_check
      _
    $region75: #{tpu_custom_call.1} parent=1 // pred_check_branch
      %135 = sbr.rel (0) target = $region77
    $region76: #{tpu_custom_call.1} parent=1 // pred_region
      %136 = dma.done [#allocation12], 1024
    $region77: #{tpu_custom_call.1} parent=1 // pred_fallthru
      _
    // Predicated region
    $region78: #{tpu_custom_call.1} parent=1 // pred_check
      _
    $region79: #{tpu_custom_call.1} parent=1 // pred_check_branch
      %138 = sbr.rel (0) target = $region81
    $region80: #{tpu_custom_call.1} parent=1 // pred_region
      %139 = dma.done [#allocation12], 1024
    $region81: #{tpu_custom_call.1} parent=1 // pred_fallthru
      _
    %v144 = vld [vmem:[#allocation2] sm:$0xff]
    %v145 = vld [vmem:[#allocation2 + $0x8] sm:$0xff]
    %v146 = vld [vmem:[#allocation2 + $0x10] sm:$0xff]
    %v147 = vld [vmem:[#allocation2 + $0x18] sm:$0xf]
    %v148 = vld [vmem:[#allocation2 + $0x1c] sm:$0xff]
    %v149 = vld [vmem:[#allocation2 + $0x24] sm:$0xff]
    %v150 = vld [vmem:[#allocation2 + $0x2c] sm:$0xff]
    %v151 = vld [vmem:[#allocation2 + $0x34] sm:$0xf]
    %v152 = vld [vmem:[#allocation5] sm:$0xff]
    %v153 = vld [vmem:[#allocation5 + $0x8] sm:$0xff]
    %v154 = vld [vmem:[#allocation5 + $0x10] sm:$0xff]
    %v155 = vld [vmem:[#allocation5 + $0x18] sm:$0xff]
    %v156 = vld [vmem:[#allocation5 + $0x20] sm:$0xff]
    %v157 = vld [vmem:[#allocation5 + $0x28] sm:$0xff]
    %v158 = vld [vmem:[#allocation5 + $0x30] sm:$0xff]
    %v159 = vld [vmem:[#allocation5 + $0x38] sm:$0xff]
    %v160 = vld [vmem:[#allocation5 + $0x40] sm:$0xff]
    %v161 = vld [vmem:[#allocation5 + $0x48] sm:$0xff]
    %v162 = vld [vmem:[#allocation5 + $0x50] sm:$0xff]
    %v163 = vld [vmem:[#allocation5 + $0x58] sm:$0xff]
    %v164 = vld [vmem:[#allocation5 + $0x60] sm:$0xff]
    %v165 = vld [vmem:[#allocation5 + $0x68] sm:$0xff]
    %v166 = vld [vmem:[#allocation5 + $0x70] sm:$0xff]
    %v167 = vld [vmem:[#allocation5 + $0x78] sm:$0xff]
    %v168 = vld [vmem:[#allocation5 + $0x80] sm:$0xff]
    %v169 = vld [vmem:[#allocation5 + $0x88] sm:$0xff]
    %v170 = vld [vmem:[#allocation5 + $0x90] sm:$0xff]
    %v171 = vld [vmem:[#allocation5 + $0x98] sm:$0xff]
    %v172 = vld [vmem:[#allocation5 + $0xa0] sm:$0xff]
    %v173 = vld [vmem:[#allocation5 + $0xa8] sm:$0xff]
    %v174 = vld [vmem:[#allocation5 + $0xb0] sm:$0xff]
    %v175 = vld [vmem:[#allocation5 + $0xb8] sm:$0xff]
    %v176 = vld [vmem:[#allocation5 + $0xc0] sm:$0xff]
    %v177 = vld [vmem:[#allocation5 + $0xc8] sm:$0xff]
    %v178 = vld [vmem:[#allocation5 + $0xd0] sm:$0xff]
    %v179 = vld [vmem:[#allocation5 + $0xd8] sm:$0xff]
    %v180 = vld [vmem:[#allocation5 + $0xe0] sm:$0xff]
    %v181 = vld [vmem:[#allocation5 + $0xe8] sm:$0xff]
    %v182 = vld [vmem:[#allocation5 + $0xf0] sm:$0xff]
    %v183 = vld [vmem:[#allocation5 + $0xf8] sm:$0xff]
    %v184 = vld [vmem:[#allocation5 + $0x100] sm:$0xff]
    %v185 = vld [vmem:[#allocation5 + $0x108] sm:$0xff]
    %v186 = vld [vmem:[#allocation5 + $0x110] sm:$0xff]
    %v187 = vld [vmem:[#allocation5 + $0x118] sm:$0xff]
    %v188 = vld [vmem:[#allocation5 + $0x120] sm:$0xff]
    %v189 = vld [vmem:[#allocation5 + $0x128] sm:$0xff]
    %v190 = vld [vmem:[#allocation5 + $0x130] sm:$0xff]
    %v191 = vld [vmem:[#allocation5 + $0x138] sm:$0xff]
    %v192 = vld [vmem:[#allocation5 + $0x140] sm:$0xff]
    %v193 = vld [vmem:[#allocation5 + $0x148] sm:$0xff]
    %v194 = vld [vmem:[#allocation5 + $0x150] sm:$0xff]
    %v195 = vld [vmem:[#allocation5 + $0x158] sm:$0xff]
    %v196 = vld [vmem:[#allocation5 + $0x160] sm:$0xff]
    %v197 = vld [vmem:[#allocation5 + $0x168] sm:$0xff]
    %v198 = vld [vmem:[#allocation5 + $0x170] sm:$0xff]
    %v199 = vld [vmem:[#allocation5 + $0x178] sm:$0xff]
    %v200 = vld [vmem:[#allocation5 + $0x180] sm:$0xff]
    %v201 = vld [vmem:[#allocation5 + $0x188] sm:$0xff]
    %v202 = vld [vmem:[#allocation5 + $0x190] sm:$0xff]
    %v203 = vld [vmem:[#allocation5 + $0x198] sm:$0xff]
    %v204 = vld [vmem:[#allocation5 + $0x1a0] sm:$0xff]
    %v205 = vld [vmem:[#allocation5 + $0x1a8] sm:$0xff]
    %v206 = vld [vmem:[#allocation5 + $0x1b0] sm:$0xff]
    %v207 = vld [vmem:[#allocation5 + $0x1b8] sm:$0xff]
    %v208 = vld [vmem:[#allocation5 + $0x1c0] sm:$0xff]
    %v209 = vld [vmem:[#allocation5 + $0x1c8] sm:$0xff]
    %v210 = vld [vmem:[#allocation5 + $0x1d0] sm:$0xff]
    %v211 = vld [vmem:[#allocation5 + $0x1d8] sm:$0xff]
    %v212 = vld [vmem:[#allocation5 + $0x1e0] sm:$0xff]
    %v213 = vld [vmem:[#allocation5 + $0x1e8] sm:$0xff]
    %v214 = vld [vmem:[#allocation5 + $0x1f0] sm:$0xff]
    %v215 = vld [vmem:[#allocation5 + $0x1f8] sm:$0xff]
    %v216 = vld [vmem:[#allocation5 + $0x200] sm:$0xff]
    %v217 = vld [vmem:[#allocation5 + $0x208] sm:$0xff]
    %v218 = vld [vmem:[#allocation5 + $0x210] sm:$0xff]
    %v219 = vld [vmem:[#allocation5 + $0x218] sm:$0xff]
    %v220 = vld [vmem:[#allocation5 + $0x220] sm:$0xff]
    %v221 = vld [vmem:[#allocation5 + $0x228] sm:$0xff]
    %v222 = vld [vmem:[#allocation5 + $0x230] sm:$0xff]
    %v223 = vld [vmem:[#allocation5 + $0x238] sm:$0xff]
    %v224 = vld [vmem:[#allocation5 + $0x240] sm:$0xff]
    %v225 = vld [vmem:[#allocation5 + $0x248] sm:$0xff]
    %v226 = vld [vmem:[#allocation5 + $0x250] sm:$0xff]
    %v227 = vld [vmem:[#allocation5 + $0x258] sm:$0xff]
    %v228 = vld [vmem:[#allocation5 + $0x260] sm:$0xff]
    %v229 = vld [vmem:[#allocation5 + $0x268] sm:$0xff]
    %v230 = vld [vmem:[#allocation5 + $0x270] sm:$0xff]
    %v231 = vld [vmem:[#allocation5 + $0x278] sm:$0xff]
    %v232 = vld [vmem:[#allocation5 + $0x280] sm:$0xff]
    %v233 = vld [vmem:[#allocation5 + $0x288] sm:$0xff]
    %v234 = vld [vmem:[#allocation5 + $0x290] sm:$0xff]
    %v235 = vld [vmem:[#allocation5 + $0x298] sm:$0xff]
    %v236 = vld [vmem:[#allocation5 + $0x2a0] sm:$0xff]
    %v237 = vld [vmem:[#allocation5 + $0x2a8] sm:$0xff]
    %v238 = vld [vmem:[#allocation5 + $0x2b0] sm:$0xff]
    %v239 = vld [vmem:[#allocation5 + $0x2b8] sm:$0xff]
    %v240 = vld [vmem:[#allocation5 + $0x2c0] sm:$0xff]
    %v241 = vld [vmem:[#allocation5 + $0x2c8] sm:$0xff]
    %v242 = vld [vmem:[#allocation5 + $0x2d0] sm:$0xff]
    %v243 = vld [vmem:[#allocation5 + $0x2d8] sm:$0xff]
    %v244 = vld [vmem:[#allocation5 + $0x2e0] sm:$0xff]
    %v245 = vld [vmem:[#allocation5 + $0x2e8] sm:$0xff]
    %v246 = vld [vmem:[#allocation5 + $0x2f0] sm:$0xff]
    %v247 = vld [vmem:[#allocation5 + $0x2f8] sm:$0xff]
    %v248 = vld [vmem:[#allocation5 + $0x300] sm:$0xff]
    %v249 = vld [vmem:[#allocation5 + $0x308] sm:$0xff]
    %v250 = vld [vmem:[#allocation5 + $0x310] sm:$0xff]
    %v251 = vld [vmem:[#allocation5 + $0x318] sm:$0xff]
    %v252 = vld [vmem:[#allocation5 + $0x320] sm:$0xff]
    %v253 = vld [vmem:[#allocation5 + $0x328] sm:$0xff]
    %v254 = vld [vmem:[#allocation5 + $0x330] sm:$0xff]
    %v255 = vld [vmem:[#allocation5 + $0x338] sm:$0xff]
    %v256 = vld [vmem:[#allocation5 + $0x340] sm:$0xff]
    %v257 = vld [vmem:[#allocation5 + $0x348] sm:$0xff]
    %v258 = vld [vmem:[#allocation5 + $0x350] sm:$0xff]
    %v259 = vld [vmem:[#allocation5 + $0x358] sm:$0xff]
    %v260 = vld [vmem:[#allocation5 + $0x360] sm:$0xff]
    %v261 = vld [vmem:[#allocation5 + $0x368] sm:$0xff]
    %v262 = vld [vmem:[#allocation5 + $0x370] sm:$0xff]
    %v263 = vld [vmem:[#allocation5 + $0x378] sm:$0xff]
    %v264 = vld [vmem:[#allocation5 + $0x380] sm:$0xff]
    %v265 = vld [vmem:[#allocation5 + $0x388] sm:$0xff]
    %v266 = vld [vmem:[#allocation5 + $0x390] sm:$0xff]
    %v267 = vld [vmem:[#allocation5 + $0x398] sm:$0xff]
    %v268 = vld [vmem:[#allocation5 + $0x3a0] sm:$0xff]
    %v269 = vld [vmem:[#allocation5 + $0x3a8] sm:$0xff]
    %v270 = vld [vmem:[#allocation5 + $0x3b0] sm:$0xff]
    %v271 = vld [vmem:[#allocation5 + $0x3b8] sm:$0xff]
    %v272 = vld [vmem:[#allocation5 + $0x3c0] sm:$0xff]
    %v273 = vld [vmem:[#allocation5 + $0x3c8] sm:$0xff]
    %v274 = vld [vmem:[#allocation5 + $0x3d0] sm:$0xff]
    %v275 = vld [vmem:[#allocation5 + $0x3d8] sm:$0xff]
    %v276 = vld [vmem:[#allocation5 + $0x3e0] sm:$0xff]
    %v277 = vld [vmem:[#allocation5 + $0x3e8] sm:$0xff]
    %v278 = vld [vmem:[#allocation5 + $0x3f0] sm:$0xff]
    %v279 = vld [vmem:[#allocation5 + $0x3f8] sm:$0xff]
    %v280 = vld [vmem:[#allocation5 + $0x400] sm:$0xff]
    %v281 = vld [vmem:[#allocation5 + $0x408] sm:$0xff]
    %v282 = vld [vmem:[#allocation5 + $0x410] sm:$0xff]
    %v283 = vld [vmem:[#allocation5 + $0x418] sm:$0xff]
    %v284 = vld [vmem:[#allocation5 + $0x420] sm:$0xff]
    %v285 = vld [vmem:[#allocation5 + $0x428] sm:$0xff]
    %v286 = vld [vmem:[#allocation5 + $0x430] sm:$0xff]
    %v287 = vld [vmem:[#allocation5 + $0x438] sm:$0xff]
    %v288 = vld [vmem:[#allocation5 + $0x440] sm:$0xff]
    %v289 = vld [vmem:[#allocation5 + $0x448] sm:$0xff]
    %v290 = vld [vmem:[#allocation5 + $0x450] sm:$0xff]
    %v291 = vld [vmem:[#allocation5 + $0x458] sm:$0xff]
    %v292 = vld [vmem:[#allocation5 + $0x460] sm:$0xff]
    %v293 = vld [vmem:[#allocation5 + $0x468] sm:$0xff]
    %v294 = vld [vmem:[#allocation5 + $0x470] sm:$0xff]
    %v295 = vld [vmem:[#allocation5 + $0x478] sm:$0xff]
    %v296 = vld [vmem:[#allocation5 + $0x480] sm:$0xff]
    %v297 = vld [vmem:[#allocation5 + $0x488] sm:$0xff]
    %v298 = vld [vmem:[#allocation5 + $0x490] sm:$0xff]
    %v299 = vld [vmem:[#allocation5 + $0x498] sm:$0xff]
    %v300 = vld [vmem:[#allocation5 + $0x4a0] sm:$0xff]
    %v301 = vld [vmem:[#allocation5 + $0x4a8] sm:$0xff]
    %v302 = vld [vmem:[#allocation5 + $0x4b0] sm:$0xff]
    %v303 = vld [vmem:[#allocation5 + $0x4b8] sm:$0xff]
    %v304 = vld [vmem:[#allocation5 + $0x4c0] sm:$0xff]
    %v305 = vld [vmem:[#allocation5 + $0x4c8] sm:$0xff]
    %v306 = vld [vmem:[#allocation5 + $0x4d0] sm:$0xff]
    %v307 = vld [vmem:[#allocation5 + $0x4d8] sm:$0xff]
    %v308 = vld [vmem:[#allocation5 + $0x4e0] sm:$0xff]
    %v309 = vld [vmem:[#allocation5 + $0x4e8] sm:$0xff]
    %v310 = vld [vmem:[#allocation5 + $0x4f0] sm:$0xff]
    %v311 = vld [vmem:[#allocation5 + $0x4f8] sm:$0xff]
    %v312 = vld [vmem:[#allocation5 + $0x500] sm:$0xff]
    %v313 = vld [vmem:[#allocation5 + $0x508] sm:$0xff]
    %v314 = vld [vmem:[#allocation5 + $0x510] sm:$0xff]
    %v315 = vld [vmem:[#allocation5 + $0x518] sm:$0xff]
    %v316 = vld [vmem:[#allocation5 + $0x520] sm:$0xff]
    %v317 = vld [vmem:[#allocation5 + $0x528] sm:$0xff]
    %v318 = vld [vmem:[#allocation5 + $0x530] sm:$0xff]
    %v319 = vld [vmem:[#allocation5 + $0x538] sm:$0xff]
    %v320 = vld [vmem:[#allocation5 + $0x540] sm:$0xff]
    %v321 = vld [vmem:[#allocation5 + $0x548] sm:$0xff]
    %v322 = vld [vmem:[#allocation5 + $0x550] sm:$0xff]
    %v323 = vld [vmem:[#allocation5 + $0x558] sm:$0xff]
    %v324 = vld [vmem:[#allocation5 + $0x560] sm:$0xff]
    %v325 = vld [vmem:[#allocation5 + $0x568] sm:$0xff]
    %v326 = vld [vmem:[#allocation5 + $0x570] sm:$0xff]
    %v327 = vld [vmem:[#allocation5 + $0x578] sm:$0xff]
    %v328 = vld [vmem:[#allocation5 + $0x580] sm:$0xff]
    %v329 = vld [vmem:[#allocation5 + $0x588] sm:$0xff]
    %v330 = vld [vmem:[#allocation5 + $0x590] sm:$0xff]
    %v331 = vld [vmem:[#allocation5 + $0x598] sm:$0xff]
    %v332 = vld [vmem:[#allocation5 + $0x5a0] sm:$0xff]
    %v333 = vld [vmem:[#allocation5 + $0x5a8] sm:$0xff]
    %v334 = vld [vmem:[#allocation5 + $0x5b0] sm:$0xff]
    %v335 = vld [vmem:[#allocation5 + $0x5b8] sm:$0xff]
    %v336 = vld [vmem:[#allocation5 + $0x5c0] sm:$0xff]
    %v337 = vld [vmem:[#allocation5 + $0x5c8] sm:$0xff]
    %v338 = vld [vmem:[#allocation5 + $0x5d0] sm:$0xff]
    %v339 = vld [vmem:[#allocation5 + $0x5d8] sm:$0xff]
    %v340 = vld [vmem:[#allocation5 + $0x5e0] sm:$0xff]
    %v341 = vld [vmem:[#allocation5 + $0x5e8] sm:$0xff]
    %v342 = vld [vmem:[#allocation5 + $0x5f0] sm:$0xff]
    %v343 = vld [vmem:[#allocation5 + $0x5f8] sm:$0xff]
    %v344 = vld [vmem:[#allocation5 + $0x600] sm:$0xff]
    %v345 = vld [vmem:[#allocation5 + $0x608] sm:$0xff]
    %v346 = vld [vmem:[#allocation5 + $0x610] sm:$0xff]
    %v347 = vld [vmem:[#allocation5 + $0x618] sm:$0xff]
    %v348 = vld [vmem:[#allocation5 + $0x620] sm:$0xff]
    %v349 = vld [vmem:[#allocation5 + $0x628] sm:$0xff]
    %v350 = vld [vmem:[#allocation5 + $0x630] sm:$0xff]
    %v351 = vld [vmem:[#allocation5 + $0x638] sm:$0xff]
    %v352 = vld [vmem:[#allocation5 + $0x640] sm:$0xff]
    %v353 = vld [vmem:[#allocation5 + $0x648] sm:$0xff]
    %v354 = vld [vmem:[#allocation5 + $0x650] sm:$0xff]
    %v355 = vld [vmem:[#allocation5 + $0x658] sm:$0xff]
    %v356 = vld [vmem:[#allocation5 + $0x660] sm:$0xff]
    %v357 = vld [vmem:[#allocation5 + $0x668] sm:$0xff]
    %v358 = vld [vmem:[#allocation5 + $0x670] sm:$0xff]
    %v359 = vld [vmem:[#allocation5 + $0x678] sm:$0xff]
    %v360 = vld [vmem:[#allocation5 + $0x680] sm:$0xff]
    %v361 = vld [vmem:[#allocation5 + $0x688] sm:$0xff]
    %v362 = vld [vmem:[#allocation5 + $0x690] sm:$0xff]
    %v363 = vld [vmem:[#allocation5 + $0x698] sm:$0xff]
    %v364 = vld [vmem:[#allocation5 + $0x6a0] sm:$0xff]
    %v365 = vld [vmem:[#allocation5 + $0x6a8] sm:$0xff]
    %v366 = vld [vmem:[#allocation5 + $0x6b0] sm:$0xff]
    %v367 = vld [vmem:[#allocation5 + $0x6b8] sm:$0xff]
    %v368 = vld [vmem:[#allocation5 + $0x6c0] sm:$0xff]
    %v369 = vld [vmem:[#allocation5 + $0x6c8] sm:$0xff]
    %v370 = vld [vmem:[#allocation5 + $0x6d0] sm:$0xff]
    %v371 = vld [vmem:[#allocation5 + $0x6d8] sm:$0xff]
    %v372 = vld [vmem:[#allocation5 + $0x6e0] sm:$0xff]
    %v373 = vld [vmem:[#allocation5 + $0x6e8] sm:$0xff]
    %v374 = vld [vmem:[#allocation5 + $0x6f0] sm:$0xff]
    %v375 = vld [vmem:[#allocation5 + $0x6f8] sm:$0xff]
    %v376 = vld [vmem:[%s2] sm:$0xf]
    %v378 = vlaneseq
    %v379 = vshrl.u32 %v378, 7
    %v380 = vsub.s32 0, %v379
    %v381 = vrot.slane %v376, %v380
    %v382 = vlaneseq
    %v383 = vshrl.u32 %v382, 7
    %v384 = vsub.s32 1, %v383
    %v385 = vrot.slane %v376, %v384
    %v386 = vlaneseq
    %v387 = vshrl.u32 %v386, 7
    %v388 = vsub.s32 2, %v387
    %v389 = vrot.slane %v376, %v388
    %v390 = vlaneseq
    %v391 = vshrl.u32 %v390, 7
    %v392 = vsub.s32 3, %v391
    %v393 = vrot.slane %v376, %v392
    %v406 = vunpack.c.l.b16 %v144
    %v407 = vunpack.c.h.b16 %v144
    %v408 = vunpack.c.l.b16 %v145
    %v409 = vunpack.c.h.b16 %v145
    %v410 = vunpack.c.l.b16 %v146
    %v411 = vunpack.c.h.b16 %v146
    %v412 = vunpack.c.l.b16 %v147
    %v413 = vunpack.c.l.b16 %v148
    %v414 = vunpack.c.h.b16 %v148
    %v415 = vunpack.c.l.b16 %v149
    %v416 = vunpack.c.h.b16 %v149
    %v417 = vunpack.c.l.b16 %v150
    %v418 = vunpack.c.h.b16 %v150
    %v419 = vunpack.c.l.b16 %v151
    %v420 = vpack.c.b16 %v413, %v406
    %v421 = vpack.c.b16 %v414, %v407
    %v422 = vpack.c.b16 %v415, %v408
    %v423 = vpack.c.b16 %v416, %v409
    %v424 = vpack.c.b16 %v417, %v410
    %v425 = vpack.c.b16 %v418, %v411
    %v426 = vpack.c.b16 %v419, %v412
    %v658 = vunpack.c.l.b16 %v152
    %v659 = vunpack.c.h.b16 %v152
    %v660 = vunpack.c.l.b16 %v153
    %v661 = vunpack.c.h.b16 %v153
    %v662 = vunpack.c.l.b16 %v154
    %v663 = vunpack.c.h.b16 %v154
    %v664 = vunpack.c.l.b16 %v155
    %v665 = vunpack.c.h.b16 %v155
    %v666 = vunpack.c.l.b16 %v156
    %v667 = vunpack.c.h.b16 %v156
    %v668 = vunpack.c.l.b16 %v157
    %v669 = vunpack.c.h.b16 %v157
    %v670 = vunpack.c.l.b16 %v158
    %v671 = vunpack.c.h.b16 %v158
    %v672 = vunpack.c.l.b16 %v159
    %v673 = vunpack.c.h.b16 %v159
    %v674 = vunpack.c.l.b16 %v160
    %v675 = vunpack.c.h.b16 %v160
    %v676 = vunpack.c.l.b16 %v161
    %v677 = vunpack.c.h.b16 %v161
    %v678 = vunpack.c.l.b16 %v162
    %v679 = vunpack.c.h.b16 %v162
    %v680 = vunpack.c.l.b16 %v163
    %v681 = vunpack.c.h.b16 %v163
    %v682 = vunpack.c.l.b16 %v164
    %v683 = vunpack.c.h.b16 %v164
    %v684 = vunpack.c.l.b16 %v165
    %v685 = vunpack.c.h.b16 %v165
    %v686 = vunpack.c.l.b16 %v166
    %v687 = vunpack.c.h.b16 %v166
    %v688 = vunpack.c.l.b16 %v167
    %v689 = vunpack.c.h.b16 %v167
    %v690 = vunpack.c.l.b16 %v168
    %v691 = vunpack.c.h.b16 %v168
    %v692 = vunpack.c.l.b16 %v169
    %v693 = vunpack.c.h.b16 %v169
    %v694 = vunpack.c.l.b16 %v170
    %v695 = vunpack.c.h.b16 %v170
    %v696 = vunpack.c.l.b16 %v171
    %v697 = vunpack.c.h.b16 %v171
    %v698 = vunpack.c.l.b16 %v172
    %v699 = vunpack.c.h.b16 %v172
    %v700 = vunpack.c.l.b16 %v173
    %v701 = vunpack.c.h.b16 %v173
    %v702 = vunpack.c.l.b16 %v174
    %v703 = vunpack.c.h.b16 %v174
    %v704 = vunpack.c.l.b16 %v175
    %v705 = vunpack.c.h.b16 %v175
    %v706 = vunpack.c.l.b16 %v176
    %v707 = vunpack.c.h.b16 %v176
    %v708 = vunpack.c.l.b16 %v177
    %v709 = vunpack.c.h.b16 %v177
    %v710 = vunpack.c.l.b16 %v178
    %v711 = vunpack.c.h.b16 %v178
    %v712 = vunpack.c.l.b16 %v179
    %v713 = vunpack.c.h.b16 %v179
    %v714 = vunpack.c.l.b16 %v180
    %v715 = vunpack.c.h.b16 %v180
    %v716 = vunpack.c.l.b16 %v181
    %v717 = vunpack.c.h.b16 %v181
    %v718 = vunpack.c.l.b16 %v182
    %v719 = vunpack.c.h.b16 %v182
    %v720 = vunpack.c.l.b16 %v183
    %v721 = vunpack.c.h.b16 %v183
    %v722 = vunpack.c.l.b16 %v184
    %v723 = vunpack.c.h.b16 %v184
    %v724 = vunpack.c.l.b16 %v185
    %v725 = vunpack.c.h.b16 %v185
    %v726 = vunpack.c.l.b16 %v186
    %v727 = vunpack.c.h.b16 %v186
    %v728 = vunpack.c.l.b16 %v187
    %v729 = vunpack.c.h.b16 %v187
    %v730 = vunpack.c.l.b16 %v188
    %v731 = vunpack.c.h.b16 %v188
    %v732 = vunpack.c.l.b16 %v189
    %v733 = vunpack.c.h.b16 %v189
    %v734 = vunpack.c.l.b16 %v190
    %v735 = vunpack.c.h.b16 %v190
    %v736 = vunpack.c.l.b16 %v191
    %v737 = vunpack.c.h.b16 %v191
    %v738 = vunpack.c.l.b16 %v192
    %v739 = vunpack.c.h.b16 %v192
    %v740 = vunpack.c.l.b16 %v193
    %v741 = vunpack.c.h.b16 %v193
    %v742 = vunpack.c.l.b16 %v194
    %v743 = vunpack.c.h.b16 %v194
    %v744 = vunpack.c.l.b16 %v195
    %v745 = vunpack.c.h.b16 %v195
    %v746 = vunpack.c.l.b16 %v196
    %v747 = vunpack.c.h.b16 %v196
    %v748 = vunpack.c.l.b16 %v197
    %v749 = vunpack.c.h.b16 %v197
    %v750 = vunpack.c.l.b16 %v198
    %v751 = vunpack.c.h.b16 %v198
    %v752 = vunpack.c.l.b16 %v199
    %v753 = vunpack.c.h.b16 %v199
    %v754 = vunpack.c.l.b16 %v200
    %v755 = vunpack.c.h.b16 %v200
    %v756 = vunpack.c.l.b16 %v201
    %v757 = vunpack.c.h.b16 %v201
    %v758 = vunpack.c.l.b16 %v202
    %v759 = vunpack.c.h.b16 %v202
    %v760 = vunpack.c.l.b16 %v203
    %v761 = vunpack.c.h.b16 %v203
    %v762 = vunpack.c.l.b16 %v204
    %v763 = vunpack.c.h.b16 %v204
    %v764 = vunpack.c.l.b16 %v205
    %v765 = vunpack.c.h.b16 %v205
    %v766 = vunpack.c.l.b16 %v206
    %v767 = vunpack.c.h.b16 %v206
    %v768 = vunpack.c.l.b16 %v207
    %v769 = vunpack.c.h.b16 %v207
    %v770 = vunpack.c.l.b16 %v208
    %v771 = vunpack.c.h.b16 %v208
    %v772 = vunpack.c.l.b16 %v209
    %v773 = vunpack.c.h.b16 %v209
    %v774 = vunpack.c.l.b16 %v210
    %v775 = vunpack.c.h.b16 %v210
    %v776 = vunpack.c.l.b16 %v211
    %v777 = vunpack.c.h.b16 %v211
    %v778 = vunpack.c.l.b16 %v212
    %v779 = vunpack.c.h.b16 %v212
    %v780 = vunpack.c.l.b16 %v213
    %v781 = vunpack.c.h.b16 %v213
    %v782 = vunpack.c.l.b16 %v214
    %v783 = vunpack.c.h.b16 %v214
    %v784 = vunpack.c.l.b16 %v215
    %v785 = vunpack.c.h.b16 %v215
    %v786 = vunpack.c.l.b16 %v216
    %v787 = vunpack.c.h.b16 %v216
    %v788 = vunpack.c.l.b16 %v217
    %v789 = vunpack.c.h.b16 %v217
    %v790 = vunpack.c.l.b16 %v218
    %v791 = vunpack.c.h.b16 %v218
    %v792 = vunpack.c.l.b16 %v219
    %v793 = vunpack.c.h.b16 %v219
    %v794 = vunpack.c.l.b16 %v220
    %v795 = vunpack.c.h.b16 %v220
    %v796 = vunpack.c.l.b16 %v221
    %v797 = vunpack.c.h.b16 %v221
    %v798 = vunpack.c.l.b16 %v222
    %v799 = vunpack.c.h.b16 %v222
    %v800 = vunpack.c.l.b16 %v223
    %v801 = vunpack.c.h.b16 %v223
    %v802 = vunpack.c.l.b16 %v224
    %v803 = vunpack.c.h.b16 %v224
    %v804 = vunpack.c.l.b16 %v225
    %v805 = vunpack.c.h.b16 %v225
    %v806 = vunpack.c.l.b16 %v226
    %v807 = vunpack.c.h.b16 %v226
    %v808 = vunpack.c.l.b16 %v227
    %v809 = vunpack.c.h.b16 %v227
    %v810 = vunpack.c.l.b16 %v228
    %v811 = vunpack.c.h.b16 %v228
    %v812 = vunpack.c.l.b16 %v229
    %v813 = vunpack.c.h.b16 %v229
    %v814 = vunpack.c.l.b16 %v230
    %v815 = vunpack.c.h.b16 %v230
    %v816 = vunpack.c.l.b16 %v231
    %v817 = vunpack.c.h.b16 %v231
    %v818 = vunpack.c.l.b16 %v232
    %v819 = vunpack.c.h.b16 %v232
    %v820 = vunpack.c.l.b16 %v233
    %v821 = vunpack.c.h.b16 %v233
    %v822 = vunpack.c.l.b16 %v234
    %v823 = vunpack.c.h.b16 %v234
    %v824 = vunpack.c.l.b16 %v235
    %v825 = vunpack.c.h.b16 %v235
    %v826 = vunpack.c.l.b16 %v236
    %v827 = vunpack.c.h.b16 %v236
    %v828 = vunpack.c.l.b16 %v237
    %v829 = vunpack.c.h.b16 %v237
    %v830 = vunpack.c.l.b16 %v238
    %v831 = vunpack.c.h.b16 %v238
    %v832 = vunpack.c.l.b16 %v239
    %v833 = vunpack.c.h.b16 %v239
    %v834 = vunpack.c.l.b16 %v240
    %v835 = vunpack.c.h.b16 %v240
    %v836 = vunpack.c.l.b16 %v241
    %v837 = vunpack.c.h.b16 %v241
    %v838 = vunpack.c.l.b16 %v242
    %v839 = vunpack.c.h.b16 %v242
    %v840 = vunpack.c.l.b16 %v243
    %v841 = vunpack.c.h.b16 %v243
    %v842 = vunpack.c.l.b16 %v244
    %v843 = vunpack.c.h.b16 %v244
    %v844 = vunpack.c.l.b16 %v245
    %v845 = vunpack.c.h.b16 %v245
    %v846 = vunpack.c.l.b16 %v246
    %v847 = vunpack.c.h.b16 %v246
    %v848 = vunpack.c.l.b16 %v247
    %v849 = vunpack.c.h.b16 %v247
    %v850 = vunpack.c.l.b16 %v248
    %v851 = vunpack.c.h.b16 %v248
    %v852 = vunpack.c.l.b16 %v249
    %v853 = vunpack.c.h.b16 %v249
    %v854 = vunpack.c.l.b16 %v250
    %v855 = vunpack.c.h.b16 %v250
    %v856 = vunpack.c.l.b16 %v251
    %v857 = vunpack.c.h.b16 %v251
    %v858 = vunpack.c.l.b16 %v252
    %v859 = vunpack.c.h.b16 %v252
    %v860 = vunpack.c.l.b16 %v253
    %v861 = vunpack.c.h.b16 %v253
    %v862 = vunpack.c.l.b16 %v254
    %v863 = vunpack.c.h.b16 %v254
    %v864 = vunpack.c.l.b16 %v255
    %v865 = vunpack.c.h.b16 %v255
    %v866 = vunpack.c.l.b16 %v256
    %v867 = vunpack.c.h.b16 %v256
    %v868 = vunpack.c.l.b16 %v257
    %v869 = vunpack.c.h.b16 %v257
    %v870 = vunpack.c.l.b16 %v258
    %v871 = vunpack.c.h.b16 %v258
    %v872 = vunpack.c.l.b16 %v259
    %v873 = vunpack.c.h.b16 %v259
    %v874 = vunpack.c.l.b16 %v260
    %v875 = vunpack.c.h.b16 %v260
    %v876 = vunpack.c.l.b16 %v261
    %v877 = vunpack.c.h.b16 %v261
    %v878 = vunpack.c.l.b16 %v262
    %v879 = vunpack.c.h.b16 %v262
    %v880 = vunpack.c.l.b16 %v263
    %v881 = vunpack.c.h.b16 %v263
    %v882 = vunpack.c.l.b16 %v264
    %v883 = vunpack.c.h.b16 %v264
    %v884 = vunpack.c.l.b16 %v265
    %v885 = vunpack.c.h.b16 %v265
    %v886 = vunpack.c.l.b16 %v266
    %v887 = vunpack.c.h.b16 %v266
    %v888 = vunpack.c.l.b16 %v267
    %v889 = vunpack.c.h.b16 %v267
    %v890 = vunpack.c.l.b16 %v268
    %v891 = vunpack.c.h.b16 %v268
    %v892 = vunpack.c.l.b16 %v269
    %v893 = vunpack.c.h.b16 %v269
    %v894 = vunpack.c.l.b16 %v270
    %v895 = vunpack.c.h.b16 %v270
    %v896 = vunpack.c.l.b16 %v271
    %v897 = vunpack.c.h.b16 %v271
    %v898 = vunpack.c.l.b16 %v272
    %v899 = vunpack.c.h.b16 %v272
    %v900 = vunpack.c.l.b16 %v273
    %v901 = vunpack.c.h.b16 %v273
    %v902 = vunpack.c.l.b16 %v274
    %v903 = vunpack.c.h.b16 %v274
    %v904 = vunpack.c.l.b16 %v275
    %v905 = vunpack.c.h.b16 %v275
    %v906 = vunpack.c.l.b16 %v276
    %v907 = vunpack.c.h.b16 %v276
    %v908 = vunpack.c.l.b16 %v277
    %v909 = vunpack.c.h.b16 %v277
    %v910 = vunpack.c.l.b16 %v278
    %v911 = vunpack.c.h.b16 %v278
    %v912 = vunpack.c.l.b16 %v279
    %v913 = vunpack.c.h.b16 %v279
    %v914 = vunpack.c.l.b16 %v280
    %v915 = vunpack.c.h.b16 %v280
    %v916 = vunpack.c.l.b16 %v281
    %v917 = vunpack.c.h.b16 %v281
    %v918 = vunpack.c.l.b16 %v282
    %v919 = vunpack.c.h.b16 %v282
    %v920 = vunpack.c.l.b16 %v283
    %v921 = vunpack.c.h.b16 %v283
    %v922 = vunpack.c.l.b16 %v284
    %v923 = vunpack.c.h.b16 %v284
    %v924 = vunpack.c.l.b16 %v285
    %v925 = vunpack.c.h.b16 %v285
    %v926 = vunpack.c.l.b16 %v286
    %v927 = vunpack.c.h.b16 %v286
    %v928 = vunpack.c.l.b16 %v287
    %v929 = vunpack.c.h.b16 %v287
    %v930 = vunpack.c.l.b16 %v288
    %v931 = vunpack.c.h.b16 %v288
    %v932 = vunpack.c.l.b16 %v289
    %v933 = vunpack.c.h.b16 %v289
    %v934 = vunpack.c.l.b16 %v290
    %v935 = vunpack.c.h.b16 %v290
    %v936 = vunpack.c.l.b16 %v291
    %v937 = vunpack.c.h.b16 %v291
    %v938 = vunpack.c.l.b16 %v292
    %v939 = vunpack.c.h.b16 %v292
    %v940 = vunpack.c.l.b16 %v293
    %v941 = vunpack.c.h.b16 %v293
    %v942 = vunpack.c.l.b16 %v294
    %v943 = vunpack.c.h.b16 %v294
    %v944 = vunpack.c.l.b16 %v295
    %v945 = vunpack.c.h.b16 %v295
    %v946 = vunpack.c.l.b16 %v296
    %v947 = vunpack.c.h.b16 %v296
    %v948 = vunpack.c.l.b16 %v297
    %v949 = vunpack.c.h.b16 %v297
    %v950 = vunpack.c.l.b16 %v298
    %v951 = vunpack.c.h.b16 %v298
    %v952 = vunpack.c.l.b16 %v299
    %v953 = vunpack.c.h.b16 %v299
    %v954 = vunpack.c.l.b16 %v300
    %v955 = vunpack.c.h.b16 %v300
    %v956 = vunpack.c.l.b16 %v301
    %v957 = vunpack.c.h.b16 %v301
    %v958 = vunpack.c.l.b16 %v302
    %v959 = vunpack.c.h.b16 %v302
    %v960 = vunpack.c.l.b16 %v303
    %v961 = vunpack.c.h.b16 %v303
    %v962 = vunpack.c.l.b16 %v304
    %v963 = vunpack.c.h.b16 %v304
    %v964 = vunpack.c.l.b16 %v305
    %v965 = vunpack.c.h.b16 %v305
    %v966 = vunpack.c.l.b16 %v306
    %v967 = vunpack.c.h.b16 %v306
    %v968 = vunpack.c.l.b16 %v307
    %v969 = vunpack.c.h.b16 %v307
    %v970 = vunpack.c.l.b16 %v308
    %v971 = vunpack.c.h.b16 %v308
    %v972 = vunpack.c.l.b16 %v309
    %v973 = vunpack.c.h.b16 %v309
    %v974 = vunpack.c.l.b16 %v310
    %v975 = vunpack.c.h.b16 %v310
    %v976 = vunpack.c.l.b16 %v311
    %v977 = vunpack.c.h.b16 %v311
    %v978 = vunpack.c.l.b16 %v312
    %v979 = vunpack.c.h.b16 %v312
    %v980 = vunpack.c.l.b16 %v313
    %v981 = vunpack.c.h.b16 %v313
    %v982 = vunpack.c.l.b16 %v314
    %v983 = vunpack.c.h.b16 %v314
    %v984 = vunpack.c.l.b16 %v315
    %v985 = vunpack.c.h.b16 %v315
    %v986 = vunpack.c.l.b16 %v316
    %v987 = vunpack.c.h.b16 %v316
    %v988 = vunpack.c.l.b16 %v317
    %v989 = vunpack.c.h.b16 %v317
    %v990 = vunpack.c.l.b16 %v318
    %v991 = vunpack.c.h.b16 %v318
    %v992 = vunpack.c.l.b16 %v319
    %v993 = vunpack.c.h.b16 %v319
    %v994 = vunpack.c.l.b16 %v320
    %v995 = vunpack.c.h.b16 %v320
    %v996 = vunpack.c.l.b16 %v321
    %v997 = vunpack.c.h.b16 %v321
    %v998 = vunpack.c.l.b16 %v322
    %v999 = vunpack.c.h.b16 %v322
    %v1000 = vunpack.c.l.b16 %v323
    %v1001 = vunpack.c.h.b16 %v323
    %v1002 = vunpack.c.l.b16 %v324
    %v1003 = vunpack.c.h.b16 %v324
    %v1004 = vunpack.c.l.b16 %v325
    %v1005 = vunpack.c.h.b16 %v325
    %v1006 = vunpack.c.l.b16 %v326
    %v1007 = vunpack.c.h.b16 %v326
    %v1008 = vunpack.c.l.b16 %v327
    %v1009 = vunpack.c.h.b16 %v327
    %v1010 = vunpack.c.l.b16 %v328
    %v1011 = vunpack.c.h.b16 %v328
    %v1012 = vunpack.c.l.b16 %v329
    %v1013 = vunpack.c.h.b16 %v329
    %v1014 = vunpack.c.l.b16 %v330
    %v1015 = vunpack.c.h.b16 %v330
    %v1016 = vunpack.c.l.b16 %v331
    %v1017 = vunpack.c.h.b16 %v331
    %v1018 = vunpack.c.l.b16 %v332
    %v1019 = vunpack.c.h.b16 %v332
    %v1020 = vunpack.c.l.b16 %v333
    %v1021 = vunpack.c.h.b16 %v333
    %v1022 = vunpack.c.l.b16 %v334
    %v1023 = vunpack.c.h.b16 %v334
    %v1024 = vunpack.c.l.b16 %v335
    %v1025 = vunpack.c.h.b16 %v335
    %v1026 = vunpack.c.l.b16 %v336
    %v1027 = vunpack.c.h.b16 %v336
    %v1028 = vunpack.c.l.b16 %v337
    %v1029 = vunpack.c.h.b16 %v337
    %v1030 = vunpack.c.l.b16 %v338
    %v1031 = vunpack.c.h.b16 %v338
    %v1032 = vunpack.c.l.b16 %v339
    %v1033 = vunpack.c.h.b16 %v339
    %v1034 = vunpack.c.l.b16 %v340
    %v1035 = vunpack.c.h.b16 %v340
    %v1036 = vunpack.c.l.b16 %v341
    %v1037 = vunpack.c.h.b16 %v341
    %v1038 = vunpack.c.l.b16 %v342
    %v1039 = vunpack.c.h.b16 %v342
    %v1040 = vunpack.c.l.b16 %v343
    %v1041 = vunpack.c.h.b16 %v343
    %v1042 = vunpack.c.l.b16 %v344
    %v1043 = vunpack.c.h.b16 %v344
    %v1044 = vunpack.c.l.b16 %v345
    %v1045 = vunpack.c.h.b16 %v345
    %v1046 = vunpack.c.l.b16 %v346
    %v1047 = vunpack.c.h.b16 %v346
    %v1048 = vunpack.c.l.b16 %v347
    %v1049 = vunpack.c.h.b16 %v347
    %v1050 = vunpack.c.l.b16 %v348
    %v1051 = vunpack.c.h.b16 %v348
    %v1052 = vunpack.c.l.b16 %v349
    %v1053 = vunpack.c.h.b16 %v349
    %v1054 = vunpack.c.l.b16 %v350
    %v1055 = vunpack.c.h.b16 %v350
    %v1056 = vunpack.c.l.b16 %v351
    %v1057 = vunpack.c.h.b16 %v351
    %v1058 = vunpack.c.l.b16 %v352
    %v1059 = vunpack.c.h.b16 %v352
    %v1060 = vunpack.c.l.b16 %v353
    %v1061 = vunpack.c.h.b16 %v353
    %v1062 = vunpack.c.l.b16 %v354
    %v1063 = vunpack.c.h.b16 %v354
    %v1064 = vunpack.c.l.b16 %v355
    %v1065 = vunpack.c.h.b16 %v355
    %v1066 = vunpack.c.l.b16 %v356
    %v1067 = vunpack.c.h.b16 %v356
    %v1068 = vunpack.c.l.b16 %v357
    %v1069 = vunpack.c.h.b16 %v357
    %v1070 = vunpack.c.l.b16 %v358
    %v1071 = vunpack.c.h.b16 %v358
    %v1072 = vunpack.c.l.b16 %v359
    %v1073 = vunpack.c.h.b16 %v359
    %v1074 = vunpack.c.l.b16 %v360
    %v1075 = vunpack.c.h.b16 %v360
    %v1076 = vunpack.c.l.b16 %v361
    %v1077 = vunpack.c.h.b16 %v361
    %v1078 = vunpack.c.l.b16 %v362
    %v1079 = vunpack.c.h.b16 %v362
    %v1080 = vunpack.c.l.b16 %v363
    %v1081 = vunpack.c.h.b16 %v363
    %v1082 = vunpack.c.l.b16 %v364
    %v1083 = vunpack.c.h.b16 %v364
    %v1084 = vunpack.c.l.b16 %v365
    %v1085 = vunpack.c.h.b16 %v365
    %v1086 = vunpack.c.l.b16 %v366
    %v1087 = vunpack.c.h.b16 %v366
    %v1088 = vunpack.c.l.b16 %v367
    %v1089 = vunpack.c.h.b16 %v367
    %v1090 = vunpack.c.l.b16 %v368
    %v1091 = vunpack.c.h.b16 %v368
    %v1092 = vunpack.c.l.b16 %v369
    %v1093 = vunpack.c.h.b16 %v369
    %v1094 = vunpack.c.l.b16 %v370
    %v1095 = vunpack.c.h.b16 %v370
    %v1096 = vunpack.c.l.b16 %v371
    %v1097 = vunpack.c.h.b16 %v371
    %v1098 = vunpack.c.l.b16 %v372
    %v1099 = vunpack.c.h.b16 %v372
    %v1100 = vunpack.c.l.b16 %v373
    %v1101 = vunpack.c.h.b16 %v373
    %v1102 = vunpack.c.l.b16 %v374
    %v1103 = vunpack.c.h.b16 %v374
    %v1104 = vunpack.c.l.b16 %v375
    %v1105 = vunpack.c.h.b16 %v375
    %v1106 = vpack.c.b16 %v662, %v658
    %v1107 = vpack.c.b16 %v663, %v659
    %v1108 = vpack.c.b16 %v664, %v660
    %v1109 = vpack.c.b16 %v665, %v661
    %v1110 = vpack.c.b16 %v670, %v666
    %v1111 = vpack.c.b16 %v671, %v667
    %v1112 = vpack.c.b16 %v672, %v668
    %v1113 = vpack.c.b16 %v673, %v669
    %v1114 = vpack.c.b16 %v678, %v674
    %v1115 = vpack.c.b16 %v679, %v675
    %v1116 = vpack.c.b16 %v680, %v676
    %v1117 = vpack.c.b16 %v681, %v677
    %v1118 = vpack.c.b16 %v686, %v682
    %v1119 = vpack.c.b16 %v687, %v683
    %v1120 = vpack.c.b16 %v688, %v684
    %v1121 = vpack.c.b16 %v689, %v685
    %v1122 = vpack.c.b16 %v694, %v690
    %v1123 = vpack.c.b16 %v695, %v691
    %v1124 = vpack.c.b16 %v696, %v692
    %v1125 = vpack.c.b16 %v697, %v693
    %v1126 = vpack.c.b16 %v702, %v698
    %v1127 = vpack.c.b16 %v703, %v699
    %v1128 = vpack.c.b16 %v704, %v700
    %v1129 = vpack.c.b16 %v705, %v701
    %v1130 = vpack.c.b16 %v710, %v706
    %v1131 = vpack.c.b16 %v711, %v707
    %v1132 = vpack.c.b16 %v712, %v708
    %v1133 = vpack.c.b16 %v713, %v709
    %v1134 = vpack.c.b16 %v718, %v714
    %v1135 = vpack.c.b16 %v719, %v715
    %v1136 = vpack.c.b16 %v720, %v716
    %v1137 = vpack.c.b16 %v721, %v717
    %v1138 = vpack.c.b16 %v726, %v722
    %v1139 = vpack.c.b16 %v727, %v723
    %v1140 = vpack.c.b16 %v728, %v724
    %v1141 = vpack.c.b16 %v729, %v725
    %v1142 = vpack.c.b16 %v734, %v730
    %v1143 = vpack.c.b16 %v735, %v731
    %v1144 = vpack.c.b16 %v736, %v732
    %v1145 = vpack.c.b16 %v737, %v733
    %v1146 = vpack.c.b16 %v742, %v738
    %v1147 = vpack.c.b16 %v743, %v739
    %v1148 = vpack.c.b16 %v744, %v740
    %v1149 = vpack.c.b16 %v745, %v741
    %v1150 = vpack.c.b16 %v750, %v746
    %v1151 = vpack.c.b16 %v751, %v747
    %v1152 = vpack.c.b16 %v752, %v748
    %v1153 = vpack.c.b16 %v753, %v749
    %v1154 = vpack.c.b16 %v758, %v754
    %v1155 = vpack.c.b16 %v759, %v755
    %v1156 = vpack.c.b16 %v760, %v756
    %v1157 = vpack.c.b16 %v761, %v757
    %v1158 = vpack.c.b16 %v766, %v762
    %v1159 = vpack.c.b16 %v767, %v763
    %v1160 = vpack.c.b16 %v768, %v764
    %v1161 = vpack.c.b16 %v769, %v765
    %v1162 = vpack.c.b16 %v774, %v770
    %v1163 = vpack.c.b16 %v775, %v771
    %v1164 = vpack.c.b16 %v776, %v772
    %v1165 = vpack.c.b16 %v777, %v773
    %v1166 = vpack.c.b16 %v782, %v778
    %v1167 = vpack.c.b16 %v783, %v779
    %v1168 = vpack.c.b16 %v784, %v780
    %v1169 = vpack.c.b16 %v785, %v781
    %v1170 = vpack.c.b16 %v790, %v786
    %v1171 = vpack.c.b16 %v791, %v787
    %v1172 = vpack.c.b16 %v792, %v788
    %v1173 = vpack.c.b16 %v793, %v789
    %v1174 = vpack.c.b16 %v798, %v794
    %v1175 = vpack.c.b16 %v799, %v795
    %v1176 = vpack.c.b16 %v800, %v796
    %v1177 = vpack.c.b16 %v801, %v797
    %v1178 = vpack.c.b16 %v806, %v802
    %v1179 = vpack.c.b16 %v807, %v803
    %v1180 = vpack.c.b16 %v808, %v804
    %v1181 = vpack.c.b16 %v809, %v805
    %v1182 = vpack.c.b16 %v814, %v810
    %v1183 = vpack.c.b16 %v815, %v811
    %v1184 = vpack.c.b16 %v816, %v812
    %v1185 = vpack.c.b16 %v817, %v813
    %v1186 = vpack.c.b16 %v822, %v818
    %v1187 = vpack.c.b16 %v823, %v819
    %v1188 = vpack.c.b16 %v824, %v820
    %v1189 = vpack.c.b16 %v825, %v821
    %v1190 = vpack.c.b16 %v830, %v826
    %v1191 = vpack.c.b16 %v831, %v827
    %v1192 = vpack.c.b16 %v832, %v828
    %v1193 = vpack.c.b16 %v833, %v829
    %v1194 = vpack.c.b16 %v838, %v834
    %v1195 = vpack.c.b16 %v839, %v835
    %v1196 = vpack.c.b16 %v840, %v836
    %v1197 = vpack.c.b16 %v841, %v837
    %v1198 = vpack.c.b16 %v846, %v842
    %v1199 = vpack.c.b16 %v847, %v843
    %v1200 = vpack.c.b16 %v848, %v844
    %v1201 = vpack.c.b16 %v849, %v845
    %v1202 = vpack.c.b16 %v854, %v850
    %v1203 = vpack.c.b16 %v855, %v851
    %v1204 = vpack.c.b16 %v856, %v852
    %v1205 = vpack.c.b16 %v857, %v853
    %v1206 = vpack.c.b16 %v862, %v858
    %v1207 = vpack.c.b16 %v863, %v859
    %v1208 = vpack.c.b16 %v864, %v860
    %v1209 = vpack.c.b16 %v865, %v861
    %v1210 = vpack.c.b16 %v870, %v866
    %v1211 = vpack.c.b16 %v871, %v867
    %v1212 = vpack.c.b16 %v872, %v868
    %v1213 = vpack.c.b16 %v873, %v869
    %v1214 = vpack.c.b16 %v878, %v874
    %v1215 = vpack.c.b16 %v879, %v875
    %v1216 = vpack.c.b16 %v880, %v876
    %v1217 = vpack.c.b16 %v881, %v877
    %v1218 = vpack.c.b16 %v886, %v882
    %v1219 = vpack.c.b16 %v887, %v883
    %v1220 = vpack.c.b16 %v888, %v884
    %v1221 = vpack.c.b16 %v889, %v885
    %v1222 = vpack.c.b16 %v894, %v890
    %v1223 = vpack.c.b16 %v895, %v891
    %v1224 = vpack.c.b16 %v896, %v892
    %v1225 = vpack.c.b16 %v897, %v893
    %v1226 = vpack.c.b16 %v902, %v898
    %v1227 = vpack.c.b16 %v903, %v899
    %v1228 = vpack.c.b16 %v904, %v900
    %v1229 = vpack.c.b16 %v905, %v901
    %v1230 = vpack.c.b16 %v910, %v906
    %v1231 = vpack.c.b16 %v911, %v907
    %v1232 = vpack.c.b16 %v912, %v908
    %v1233 = vpack.c.b16 %v913, %v909
    %v1234 = vpack.c.b16 %v918, %v914
    %v1235 = vpack.c.b16 %v919, %v915
    %v1236 = vpack.c.b16 %v920, %v916
    %v1237 = vpack.c.b16 %v921, %v917
    %v1238 = vpack.c.b16 %v926, %v922
    %v1239 = vpack.c.b16 %v927, %v923
    %v1240 = vpack.c.b16 %v928, %v924
    %v1241 = vpack.c.b16 %v929, %v925
    %v1242 = vpack.c.b16 %v934, %v930
    %v1243 = vpack.c.b16 %v935, %v931
    %v1244 = vpack.c.b16 %v936, %v932
    %v1245 = vpack.c.b16 %v937, %v933
    %v1246 = vpack.c.b16 %v942, %v938
    %v1247 = vpack.c.b16 %v943, %v939
    %v1248 = vpack.c.b16 %v944, %v940
    %v1249 = vpack.c.b16 %v945, %v941
    %v1250 = vpack.c.b16 %v950, %v946
    %v1251 = vpack.c.b16 %v951, %v947
    %v1252 = vpack.c.b16 %v952, %v948
    %v1253 = vpack.c.b16 %v953, %v949
    %v1254 = vpack.c.b16 %v958, %v954
    %v1255 = vpack.c.b16 %v959, %v955
    %v1256 = vpack.c.b16 %v960, %v956
    %v1257 = vpack.c.b16 %v961, %v957
    %v1258 = vpack.c.b16 %v966, %v962
    %v1259 = vpack.c.b16 %v967, %v963
    %v1260 = vpack.c.b16 %v968, %v964
    %v1261 = vpack.c.b16 %v969, %v965
    %v1262 = vpack.c.b16 %v974, %v970
    %v1263 = vpack.c.b16 %v975, %v971
    %v1264 = vpack.c.b16 %v976, %v972
    %v1265 = vpack.c.b16 %v977, %v973
    %v1266 = vpack.c.b16 %v982, %v978
    %v1267 = vpack.c.b16 %v983, %v979
    %v1268 = vpack.c.b16 %v984, %v980
    %v1269 = vpack.c.b16 %v985, %v981
    %v1270 = vpack.c.b16 %v990, %v986
    %v1271 = vpack.c.b16 %v991, %v987
    %v1272 = vpack.c.b16 %v992, %v988
    %v1273 = vpack.c.b16 %v993, %v989
    %v1274 = vpack.c.b16 %v998, %v994
    %v1275 = vpack.c.b16 %v999, %v995
    %v1276 = vpack.c.b16 %v1000, %v996
    %v1277 = vpack.c.b16 %v1001, %v997
    %v1278 = vpack.c.b16 %v1006, %v1002
    %v1279 = vpack.c.b16 %v1007, %v1003
    %v1280 = vpack.c.b16 %v1008, %v1004
    %v1281 = vpack.c.b16 %v1009, %v1005
    %v1282 = vpack.c.b16 %v1014, %v1010
    %v1283 = vpack.c.b16 %v1015, %v1011
    %v1284 = vpack.c.b16 %v1016, %v1012
    %v1285 = vpack.c.b16 %v1017, %v1013
    %v1286 = vpack.c.b16 %v1022, %v1018
    %v1287 = vpack.c.b16 %v1023, %v1019
    %v1288 = vpack.c.b16 %v1024, %v1020
    %v1289 = vpack.c.b16 %v1025, %v1021
    %v1290 = vpack.c.b16 %v1030, %v1026
    %v1291 = vpack.c.b16 %v1031, %v1027
    %v1292 = vpack.c.b16 %v1032, %v1028
    %v1293 = vpack.c.b16 %v1033, %v1029
    %v1294 = vpack.c.b16 %v1038, %v1034
    %v1295 = vpack.c.b16 %v1039, %v1035
    %v1296 = vpack.c.b16 %v1040, %v1036
    %v1297 = vpack.c.b16 %v1041, %v1037
    %v1298 = vpack.c.b16 %v1046, %v1042
    %v1299 = vpack.c.b16 %v1047, %v1043
    %v1300 = vpack.c.b16 %v1048, %v1044
    %v1301 = vpack.c.b16 %v1049, %v1045
    %v1302 = vpack.c.b16 %v1054, %v1050
    %v1303 = vpack.c.b16 %v1055, %v1051
    %v1304 = vpack.c.b16 %v1056, %v1052
    %v1305 = vpack.c.b16 %v1057, %v1053
    %v1306 = vpack.c.b16 %v1062, %v1058
    %v1307 = vpack.c.b16 %v1063, %v1059
    %v1308 = vpack.c.b16 %v1064, %v1060
    %v1309 = vpack.c.b16 %v1065, %v1061
    %v1310 = vpack.c.b16 %v1070, %v1066
    %v1311 = vpack.c.b16 %v1071, %v1067
    %v1312 = vpack.c.b16 %v1072, %v1068
    %v1313 = vpack.c.b16 %v1073, %v1069
    %v1314 = vpack.c.b16 %v1078, %v1074
    %v1315 = vpack.c.b16 %v1079, %v1075
    %v1316 = vpack.c.b16 %v1080, %v1076
    %v1317 = vpack.c.b16 %v1081, %v1077
    %v1318 = vpack.c.b16 %v1086, %v1082
    %v1319 = vpack.c.b16 %v1087, %v1083
    %v1320 = vpack.c.b16 %v1088, %v1084
    %v1321 = vpack.c.b16 %v1089, %v1085
    %v1322 = vpack.c.b16 %v1094, %v1090
    %v1323 = vpack.c.b16 %v1095, %v1091
    %v1324 = vpack.c.b16 %v1096, %v1092
    %v1325 = vpack.c.b16 %v1097, %v1093
    %v1326 = vpack.c.b16 %v1102, %v1098
    %v1327 = vpack.c.b16 %v1103, %v1099
    %v1328 = vpack.c.b16 %v1104, %v1100
    %v1329 = vpack.c.b16 %v1105, %v1101
    %1554 = vmatprep.subr.bf16.mxu0 %v1107
    %1555 = vmatpush1.bf16.msra.mxu0 %v1106
    %1556 = vmatprep.subr.bf16.mxu0 %v1111
    %1557 = vmatpush1.bf16.msra.mxu0 %v1110
    %1558 = vmatprep.subr.bf16.mxu0 %v1115
    %1559 = vmatpush1.bf16.msra.mxu0 %v1114
    %1560 = vmatprep.subr.bf16.mxu0 %v1119
    %1561 = vmatpush1.bf16.msra.mxu0 %v1118
    %1562 = vmatprep.subr.bf16.mxu0 %v1123
    %1563 = vmatpush1.bf16.msra.mxu0 %v1122
    %1564 = vmatprep.subr.bf16.mxu0 %v1127
    %1565 = vmatpush1.bf16.msra.mxu0 %v1126
    %1566 = vmatprep.subr.bf16.mxu0 %v1131
    %1567 = vmatpush1.bf16.msra.mxu0 %v1130
    %1568 = vmatprep.subr.bf16.mxu0 %v1135
    %1569 = vmatpush1.bf16.msra.mxu0 %v1134
    %1570 = vmatprep.subr.bf16.mxu0 %v1139
    %1571 = vmatpush1.bf16.msra.mxu0 %v1138
    %1572 = vmatprep.subr.bf16.mxu0 %v1143
    %1573 = vmatpush1.bf16.msra.mxu0 %v1142
    %1574 = vmatprep.subr.bf16.mxu0 %v1147
    %1575 = vmatpush1.bf16.msra.mxu0 %v1146
    %1576 = vmatprep.subr.bf16.mxu0 %v1151
    %1577 = vmatpush1.bf16.msra.mxu0 %v1150
    %1578 = vmatprep.subr.bf16.mxu0 %v1155
    %1579 = vmatpush1.bf16.msra.mxu0 %v1154
    %1580 = vmatprep.subr.bf16.mxu0 %v1159
    %1581 = vmatpush1.bf16.msra.mxu0 %v1158
    %1582 = vmatprep.subr.bf16.mxu0 %v1163
    %1583 = vmatpush1.bf16.msra.mxu0 %v1162
    %1584 = vmatprep.subr.bf16.mxu0 %v1167
    %1585 = vmatpush1.bf16.msra.mxu0 %v1166
    %1586 = vmatprep.mubr.bf16.mxu0 %v421
    %1587 = vmatmul.mubr.bf16.gmra.mrb[0].mxu0 %v420
    %v1588 = vpop.f32.mrb[0].mxu0
    %v1589 = vadd.f32 %v381, %v1588
    %v1590 = vpop.f32.mrb[0].mxu0
    %v1591 = vadd.f32 %v385, %v1590
    %v1592 = vpop.f32.mrb[0].mxu0
    %v1593 = vadd.f32 %v381, %v1592
    %v1594 = vpop.f32.mrb[0].mxu0
    %v1595 = vadd.f32 %v385, %v1594
    %1596 = vdwg.mxu0
    %1597 = vmatprep.subr.bf16.mxu0 %v1171
    %1598 = vmatpush1.bf16.msra.mxu0 %v1170
    %1599 = vmatprep.subr.bf16.mxu0 %v1175
    %1600 = vmatpush1.bf16.msra.mxu0 %v1174
    %1601 = vmatprep.subr.bf16.mxu0 %v1179
    %1602 = vmatpush1.bf16.msra.mxu0 %v1178
    %1603 = vmatprep.subr.bf16.mxu0 %v1183
    %1604 = vmatpush1.bf16.msra.mxu0 %v1182
    %1605 = vmatprep.subr.bf16.mxu0 %v1187
    %1606 = vmatpush1.bf16.msra.mxu0 %v1186
    %1607 = vmatprep.subr.bf16.mxu0 %v1191
    %1608 = vmatpush1.bf16.msra.mxu0 %v1190
    %1609 = vmatprep.subr.bf16.mxu0 %v1195
    %1610 = vmatpush1.bf16.msra.mxu0 %v1194
    %1611 = vmatprep.subr.bf16.mxu0 %v1199
    %1612 = vmatpush1.bf16.msra.mxu0 %v1198
    %1613 = vmatprep.subr.bf16.mxu0 %v1203
    %1614 = vmatpush1.bf16.msra.mxu0 %v1202
    %1615 = vmatprep.subr.bf16.mxu0 %v1207
    %1616 = vmatpush1.bf16.msra.mxu0 %v1206
    %1617 = vmatprep.subr.bf16.mxu0 %v1211
    %1618 = vmatpush1.bf16.msra.mxu0 %v1210
    %1619 = vmatprep.subr.bf16.mxu0 %v1215
    %1620 = vmatpush1.bf16.msra.mxu0 %v1214
    %1621 = vmatprep.subr.bf16.mxu0 %v1219
    %1622 = vmatpush1.bf16.msra.mxu0 %v1218
    %1623 = vmatprep.subr.bf16.mxu0 %v1223
    %1624 = vmatpush1.bf16.msra.mxu0 %v1222
    %1625 = vmatprep.subr.bf16.mxu0 %v1227
    %1626 = vmatpush1.bf16.msra.mxu0 %v1226
    %1627 = vmatprep.subr.bf16.mxu0 %v1231
    %1628 = vmatpush1.bf16.msra.mxu0 %v1230
    %1629 = vmatprep.mubr.bf16.mxu0 %v423
    %1630 = vmatmul.mubr.bf16.gmra.mrb[0].mxu0 %v422
    %v1631 = vpop.f32.mrb[0].mxu0
    %v1632 = vadd.f32 %v1589, %v1631
    %v1633 = vpop.f32.mrb[0].mxu0
    %v1634 = vadd.f32 %v1591, %v1633
    %v1635 = vpop.f32.mrb[0].mxu0
    %v1636 = vadd.f32 %v1593, %v1635
    %v1637 = vpop.f32.mrb[0].mxu0
    %v1638 = vadd.f32 %v1595, %v1637
    %1639 = vdwg.mxu0
    %1640 = vmatprep.subr.bf16.mxu0 %v1235
    %1641 = vmatpush1.bf16.msra.mxu0 %v1234
    %1642 = vmatprep.subr.bf16.mxu0 %v1239
    %1643 = vmatpush1.bf16.msra.mxu0 %v1238
    %1644 = vmatprep.subr.bf16.mxu0 %v1243
    %1645 = vmatpush1.bf16.msra.mxu0 %v1242
    %1646 = vmatprep.subr.bf16.mxu0 %v1247
    %1647 = vmatpush1.bf16.msra.mxu0 %v1246
    %1648 = vmatprep.subr.bf16.mxu0 %v1251
    %1649 = vmatpush1.bf16.msra.mxu0 %v1250
    %1650 = vmatprep.subr.bf16.mxu0 %v1255
    %1651 = vmatpush1.bf16.msra.mxu0 %v1254
    %1652 = vmatprep.subr.bf16.mxu0 %v1259
    %1653 = vmatpush1.bf16.msra.mxu0 %v1258
    %1654 = vmatprep.subr.bf16.mxu0 %v1263
    %1655 = vmatpush1.bf16.msra.mxu0 %v1262
    %1656 = vmatprep.subr.bf16.mxu0 %v1267
    %1657 = vmatpush1.bf16.msra.mxu0 %v1266
    %1658 = vmatprep.subr.bf16.mxu0 %v1271
    %1659 = vmatpush1.bf16.msra.mxu0 %v1270
    %1660 = vmatprep.subr.bf16.mxu0 %v1275
    %1661 = vmatpush1.bf16.msra.mxu0 %v1274
    %1662 = vmatprep.subr.bf16.mxu0 %v1279
    %1663 = vmatpush1.bf16.msra.mxu0 %v1278
    %1664 = vmatprep.subr.bf16.mxu0 %v1283
    %1665 = vmatpush1.bf16.msra.mxu0 %v1282
    %1666 = vmatprep.subr.bf16.mxu0 %v1287
    %1667 = vmatpush1.bf16.msra.mxu0 %v1286
    %1668 = vmatprep.subr.bf16.mxu0 %v1291
    %1669 = vmatpush1.bf16.msra.mxu0 %v1290
    %1670 = vmatprep.subr.bf16.mxu0 %v1295
    %1671 = vmatpush1.bf16.msra.mxu0 %v1294
    %1672 = vmatprep.mubr.bf16.mxu0 %v425
    %1673 = vmatmul.mubr.bf16.gmra.mrb[0].mxu0 %v424
    %v1674 = vpop.f32.mrb[0].mxu0
    %v1675 = vadd.f32 %v1632, %v1674
    %v1676 = vpop.f32.mrb[0].mxu0
    %v1677 = vadd.f32 %v1634, %v1676
    %v1678 = vpop.f32.mrb[0].mxu0
    %v1679 = vadd.f32 %v1636, %v1678
    %v1680 = vpop.f32.mrb[0].mxu0
    %v1681 = vadd.f32 %v1638, %v1680
    %1682 = vdwg.mxu0
    %1683 = vmatprep.subr.bf16.mxu0 %v1299
    %1684 = vmatpush1.bf16.msra.mxu0 %v1298
    %1685 = vmatprep.subr.bf16.mxu0 %v1303
    %1686 = vmatpush1.bf16.msra.mxu0 %v1302
    %1687 = vmatprep.subr.bf16.mxu0 %v1307
    %1688 = vmatpush1.bf16.msra.mxu0 %v1306
    %1689 = vmatprep.subr.bf16.mxu0 %v1311
    %1690 = vmatpush1.bf16.msra.mxu0 %v1310
    %1691 = vmatprep.subr.bf16.mxu0 %v1315
    %1692 = vmatpush1.bf16.msra.mxu0 %v1314
    %1693 = vmatprep.subr.bf16.mxu0 %v1319
    %1694 = vmatpush1.bf16.msra.mxu0 %v1318
    %1695 = vmatprep.subr.bf16.mxu0 %v1323
    %1696 = vmatpush1.bf16.msra.mxu0 %v1322
    %1697 = vmatprep.subr.bf16.mxu0 %v1327
    %1698 = vmatpush1.bf16.msra.mxu0 %v1326
    %1699 = vmatprep.subr.bf16.mxu0 0
    %1700 = vmatpush1.bf16.msra.mxu0 0
    %1701 = vmatprep.subr.bf16.mxu0 0
    %1702 = vmatpush1.bf16.msra.mxu0 0
    %1703 = vmatprep.subr.bf16.mxu0 0
    %1704 = vmatpush1.bf16.msra.mxu0 0
    %1705 = vmatprep.subr.bf16.mxu0 0
    %1706 = vmatpush1.bf16.msra.mxu0 0
    %1707 = vmatprep.subr.bf16.mxu0 0
    %1708 = vmatpush1.bf16.msra.mxu0 0
    %1709 = vmatprep.subr.bf16.mxu0 0
    %1710 = vmatpush1.bf16.msra.mxu0 0
    %1711 = vmatprep.subr.bf16.mxu0 0
    %1712 = vmatpush1.bf16.msra.mxu0 0
    %1713 = vmatprep.subr.bf16.mxu0 0
    %1714 = vmatpush1.bf16.msra.mxu0 0
    %1715 = vmatprep.mubr.bf16.mxu0 0
    %1716 = vmatmul.mubr.bf16.gmra.mrb[0].mxu0 %v426
    %v1717 = vpop.f32.mrb[0].mxu0
    %v1718 = vadd.f32 %v1675, %v1717
    %v1719 = vpop.f32.mrb[0].mxu0
    %v1720 = vadd.f32 %v1677, %v1719
    %v1721 = vpop.f32.mrb[0].mxu0
    %v1722 = vadd.f32 %v1679, %v1721
    %v1723 = vpop.f32.mrb[0].mxu0
    %v1724 = vadd.f32 %v1681, %v1723
    %1725 = vdwg.mxu0
    %1726 = vmatprep.subr.bf16.mxu0 %v1109
    %1727 = vmatpush1.bf16.msra.mxu0 %v1108
    %1728 = vmatprep.subr.bf16.mxu0 %v1113
    %1729 = vmatpush1.bf16.msra.mxu0 %v1112
    %1730 = vmatprep.subr.bf16.mxu0 %v1117
    %1731 = vmatpush1.bf16.msra.mxu0 %v1116
    %1732 = vmatprep.subr.bf16.mxu0 %v1121
    %1733 = vmatpush1.bf16.msra.mxu0 %v1120
    %1734 = vmatprep.subr.bf16.mxu0 %v1125
    %1735 = vmatpush1.bf16.msra.mxu0 %v1124
    %1736 = vmatprep.subr.bf16.mxu0 %v1129
    %1737 = vmatpush1.bf16.msra.mxu0 %v1128
    %1738 = vmatprep.subr.bf16.mxu0 %v1133
    %1739 = vmatpush1.bf16.msra.mxu0 %v1132
    %1740 = vmatprep.subr.bf16.mxu0 %v1137
    %1741 = vmatpush1.bf16.msra.mxu0 %v1136
    %1742 = vmatprep.subr.bf16.mxu0 %v1141
    %1743 = vmatpush1.bf16.msra.mxu0 %v1140
    %1744 = vmatprep.subr.bf16.mxu0 %v1145
    %1745 = vmatpush1.bf16.msra.mxu0 %v1144
    %1746 = vmatprep.subr.bf16.mxu0 %v1149
    %1747 = vmatpush1.bf16.msra.mxu0 %v1148
    %1748 = vmatprep.subr.bf16.mxu0 %v1153
    %1749 = vmatpush1.bf16.msra.mxu0 %v1152
    %1750 = vmatprep.subr.bf16.mxu0 %v1157
    %1751 = vmatpush1.bf16.msra.mxu0 %v1156
    %1752 = vmatprep.subr.bf16.mxu0 %v1161
    %1753 = vmatpush1.bf16.msra.mxu0 %v1160
    %1754 = vmatprep.subr.bf16.mxu0 %v1165
    %1755 = vmatpush1.bf16.msra.mxu0 %v1164
    %1756 = vmatprep.subr.bf16.mxu0 %v1169
    %1757 = vmatpush1.bf16.msra.mxu0 %v1168
    %1758 = vmatprep.mubr.bf16.mxu0 %v421
    %1759 = vmatmul.mubr.bf16.gmra.mrb[0].mxu0 %v420
    %v1760 = vpop.f32.mrb[0].mxu0
    %v1761 = vadd.f32 %v389, %v1760
    %v1762 = vpop.f32.mrb[0].mxu0
    %v1763 = vadd.f32 %v393, %v1762
    %v1764 = vpop.f32.mrb[0].mxu0
    %v1765 = vadd.f32 %v389, %v1764
    %v1766 = vpop.f32.mrb[0].mxu0
    %v1767 = vadd.f32 %v393, %v1766
    %1768 = vdwg.mxu0
    %1769 = vmatprep.subr.bf16.mxu0 %v1173
    %1770 = vmatpush1.bf16.msra.mxu0 %v1172
    %1771 = vmatprep.subr.bf16.mxu0 %v1177
    %1772 = vmatpush1.bf16.msra.mxu0 %v1176
    %1773 = vmatprep.subr.bf16.mxu0 %v1181
    %1774 = vmatpush1.bf16.msra.mxu0 %v1180
    %1775 = vmatprep.subr.bf16.mxu0 %v1185
    %1776 = vmatpush1.bf16.msra.mxu0 %v1184
    %1777 = vmatprep.subr.bf16.mxu0 %v1189
    %1778 = vmatpush1.bf16.msra.mxu0 %v1188
    %1779 = vmatprep.subr.bf16.mxu0 %v1193
    %1780 = vmatpush1.bf16.msra.mxu0 %v1192
    %1781 = vmatprep.subr.bf16.mxu0 %v1197
    %1782 = vmatpush1.bf16.msra.mxu0 %v1196
    %1783 = vmatprep.subr.bf16.mxu0 %v1201
    %1784 = vmatpush1.bf16.msra.mxu0 %v1200
    %1785 = vmatprep.subr.bf16.mxu0 %v1205
    %1786 = vmatpush1.bf16.msra.mxu0 %v1204
    %1787 = vmatprep.subr.bf16.mxu0 %v1209
    %1788 = vmatpush1.bf16.msra.mxu0 %v1208
    %1789 = vmatprep.subr.bf16.mxu0 %v1213
    %1790 = vmatpush1.bf16.msra.mxu0 %v1212
    %1791 = vmatprep.subr.bf16.mxu0 %v1217
    %1792 = vmatpush1.bf16.msra.mxu0 %v1216
    %1793 = vmatprep.subr.bf16.mxu0 %v1221
    %1794 = vmatpush1.bf16.msra.mxu0 %v1220
    %1795 = vmatprep.subr.bf16.mxu0 %v1225
    %1796 = vmatpush1.bf16.msra.mxu0 %v1224
    %1797 = vmatprep.subr.bf16.mxu0 %v1229
    %1798 = vmatpush1.bf16.msra.mxu0 %v1228
    %1799 = vmatprep.subr.bf16.mxu0 %v1233
    %1800 = vmatpush1.bf16.msra.mxu0 %v1232
    %1801 = vmatprep.mubr.bf16.mxu0 %v423
    %1802 = vmatmul.mubr.bf16.gmra.mrb[0].mxu0 %v422
    %v1803 = vpop.f32.mrb[0].mxu0
    %v1804 = vadd.f32 %v1761, %v1803
    %v1805 = vpop.f32.mrb[0].mxu0
    %v1806 = vadd.f32 %v1763, %v1805
    %v1807 = vpop.f32.mrb[0].mxu0
    %v1808 = vadd.f32 %v1765, %v1807
    %v1809 = vpop.f32.mrb[0].mxu0
    %v1810 = vadd.f32 %v1767, %v1809
    %1811 = vdwg.mxu0
    %1812 = vmatprep.subr.bf16.mxu0 %v1237
    %1813 = vmatpush1.bf16.msra.mxu0 %v1236
    %1814 = vmatprep.subr.bf16.mxu0 %v1241
    %1815 = vmatpush1.bf16.msra.mxu0 %v1240
    %1816 = vmatprep.subr.bf16.mxu0 %v1245
    %1817 = vmatpush1.bf16.msra.mxu0 %v1244
    %1818 = vmatprep.subr.bf16.mxu0 %v1249
    %1819 = vmatpush1.bf16.msra.mxu0 %v1248
    %1820 = vmatprep.subr.bf16.mxu0 %v1253
    %1821 = vmatpush1.bf16.msra.mxu0 %v1252
    %1822 = vmatprep.subr.bf16.mxu0 %v1257
    %1823 = vmatpush1.bf16.msra.mxu0 %v1256
    %1824 = vmatprep.subr.bf16.mxu0 %v1261
    %1825 = vmatpush1.bf16.msra.mxu0 %v1260
    %1826 = vmatprep.subr.bf16.mxu0 %v1265
    %1827 = vmatpush1.bf16.msra.mxu0 %v1264
    %1828 = vmatprep.subr.bf16.mxu0 %v1269
    %1829 = vmatpush1.bf16.msra.mxu0 %v1268
    %1830 = vmatprep.subr.bf16.mxu0 %v1273
    %1831 = vmatpush1.bf16.msra.mxu0 %v1272
    %1832 = vmatprep.subr.bf16.mxu0 %v1277
    %1833 = vmatpush1.bf16.msra.mxu0 %v1276
    %1834 = vmatprep.subr.bf16.mxu0 %v1281
    %1835 = vmatpush1.bf16.msra.mxu0 %v1280
    %1836 = vmatprep.subr.bf16.mxu0 %v1285
    %1837 = vmatpush1.bf16.msra.mxu0 %v1284
    %1838 = vmatprep.subr.bf16.mxu0 %v1289
    %1839 = vmatpush1.bf16.msra.mxu0 %v1288
    %1840 = vmatprep.subr.bf16.mxu0 %v1293
    %1841 = vmatpush1.bf16.msra.mxu0 %v1292
    %1842 = vmatprep.subr.bf16.mxu0 %v1297
    %1843 = vmatpush1.bf16.msra.mxu0 %v1296
    %1844 = vmatprep.mubr.bf16.mxu0 %v425
    %1845 = vmatmul.mubr.bf16.gmra.mrb[0].mxu0 %v424
    %v1846 = vpop.f32.mrb[0].mxu0
    %v1847 = vadd.f32 %v1804, %v1846
    %v1848 = vpop.f32.mrb[0].mxu0
    %v1849 = vadd.f32 %v1806, %v1848
    %v1850 = vpop.f32.mrb[0].mxu0
    %v1851 = vadd.f32 %v1808, %v1850
    %v1852 = vpop.f32.mrb[0].mxu0
    %v1853 = vadd.f32 %v1810, %v1852
    %1854 = vdwg.mxu0
    %1855 = vmatprep.subr.bf16.mxu0 %v1301
    %1856 = vmatpush1.bf16.msra.mxu0 %v1300
    %1857 = vmatprep.subr.bf16.mxu0 %v1305
    %1858 = vmatpush1.bf16.msra.mxu0 %v1304
    %1859 = vmatprep.subr.bf16.mxu0 %v1309
    %1860 = vmatpush1.bf16.msra.mxu0 %v1308
    %1861 = vmatprep.subr.bf16.mxu0 %v1313
    %1862 = vmatpush1.bf16.msra.mxu0 %v1312
    %1863 = vmatprep.subr.bf16.mxu0 %v1317
    %1864 = vmatpush1.bf16.msra.mxu0 %v1316
    %1865 = vmatprep.subr.bf16.mxu0 %v1321
    %1866 = vmatpush1.bf16.msra.mxu0 %v1320
    %1867 = vmatprep.subr.bf16.mxu0 %v1325
    %1868 = vmatpush1.bf16.msra.mxu0 %v1324
    %1869 = vmatprep.subr.bf16.mxu0 %v1329
    %1870 = vmatpush1.bf16.msra.mxu0 %v1328
    %1871 = vmatprep.subr.bf16.mxu0 0
    %1872 = vmatpush1.bf16.msra.mxu0 0
    %1873 = vmatprep.subr.bf16.mxu0 0
    %1874 = vmatpush1.bf16.msra.mxu0 0
    %1875 = vmatprep.subr.bf16.mxu0 0
    %1876 = vmatpush1.bf16.msra.mxu0 0
    %1877 = vmatprep.subr.bf16.mxu0 0
    %1878 = vmatpush1.bf16.msra.mxu0 0
    %1879 = vmatprep.subr.bf16.mxu0 0
    %1880 = vmatpush1.bf16.msra.mxu0 0
    %1881 = vmatprep.subr.bf16.mxu0 0
    %1882 = vmatpush1.bf16.msra.mxu0 0
    %1883 = vmatprep.subr.bf16.mxu0 0
    %1884 = vmatpush1.bf16.msra.mxu0 0
    %1885 = vmatprep.subr.bf16.mxu0 0
    %1886 = vmatpush1.bf16.msra.mxu0 0
    %1887 = vmatprep.mubr.bf16.mxu0 0
    %1888 = vmatmul.mubr.bf16.gmra.mrb[0].mxu0 %v426
    %v1889 = vpop.f32.mrb[0].mxu0
    %v1890 = vadd.f32 %v1847, %v1889
    %v1891 = vpop.f32.mrb[0].mxu0
    %v1892 = vadd.f32 %v1849, %v1891
    %v1893 = vpop.f32.mrb[0].mxu0
    %v1894 = vadd.f32 %v1851, %v1893
    %v1895 = vpop.f32.mrb[0].mxu0
    %v1896 = vadd.f32 %v1853, %v1895
    %1897 = vdwg.mxu0
    %v1898 = vpack.c.bf16 %v1722, %v1718
    %v1899 = vpack.c.bf16 %v1724, %v1720
    %v1900 = vpack.c.bf16 %v1894, %v1890
    %v1901 = vpack.c.bf16 %v1896, %v1892
    %v1902 = vmul.bf16 %v1898, 1056980736
    %v1903 = vmul.bf16 %v1899, 1056980736
    %v1904 = vmul.bf16 %v1900, 1056980736
    %v1905 = vmul.bf16 %v1901, 1056980736
    %v1906 = vmul.bf16 %v1898, 1060454197
    %v1907 = vmul.bf16 %v1899, 1060454197
    %v1908 = vmul.bf16 %v1900, 1060454197
    %v1909 = vmul.bf16 %v1901, 1060454197
    %v1910 = verf.bf16.pop %v1906
    %v1911 = verf.bf16.pop %v1907
    %v1912 = verf.bf16.pop %v1908
    %v1913 = verf.bf16.pop %v1909
    %v1914 = vadd.bf16 %v1910, 1065369472
    %v1915 = vadd.bf16 %v1911, 1065369472
    %v1916 = vadd.bf16 %v1912, 1065369472
    %v1917 = vadd.bf16 %v1913, 1065369472
    %v1918 = vmul.bf16 %v1902, %v1914
    %v1919 = vmul.bf16 %v1903, %v1915
    %v1920 = vmul.bf16 %v1904, %v1916
    %v1921 = vmul.bf16 %v1905, %v1917
    %v1922 = vld [vmem:[#allocation7] sm:$0xff]
    %v1923 = vld [vmem:[#allocation7 + $0x8] sm:$0xff]
    %v1924 = vld [vmem:[#allocation7 + $0x10] sm:$0xff]
    %v1925 = vld [vmem:[#allocation7 + $0x18] sm:$0xff]
    %v1926 = vld [vmem:[#allocation7 + $0x20] sm:$0xff]
    %v1927 = vld [vmem:[#allocation7 + $0x28] sm:$0xff]
    %v1928 = vld [vmem:[#allocation7 + $0x30] sm:$0xff]
    %v1929 = vld [vmem:[#allocation7 + $0x38] sm:$0xff]
    %v1930 = vld [vmem:[#allocation7 + $0x40] sm:$0xff]
    %v1931 = vld [vmem:[#allocation7 + $0x48] sm:$0xff]
    %v1932 = vld [vmem:[#allocation7 + $0x50] sm:$0xff]
    %v1933 = vld [vmem:[#allocation7 + $0x58] sm:$0xff]
    %v1934 = vld [vmem:[#allocation7 + $0x60] sm:$0xff]
    %v1935 = vld [vmem:[#allocation7 + $0x68] sm:$0xff]
    %v1936 = vld [vmem:[#allocation7 + $0x70] sm:$0xff]
    %v1937 = vld [vmem:[#allocation7 + $0x78] sm:$0xff]
    %v1938 = vld [vmem:[#allocation7 + $0x80] sm:$0xff]
    %v1939 = vld [vmem:[#allocation7 + $0x88] sm:$0xff]
    %v1940 = vld [vmem:[#allocation7 + $0x90] sm:$0xff]
    %v1941 = vld [vmem:[#allocation7 + $0x98] sm:$0xff]
    %v1942 = vld [vmem:[#allocation7 + $0xa0] sm:$0xff]
    %v1943 = vld [vmem:[#allocation7 + $0xa8] sm:$0xff]
    %v1944 = vld [vmem:[#allocation7 + $0xb0] sm:$0xff]
    %v1945 = vld [vmem:[#allocation7 + $0xb8] sm:$0xff]
    %v1946 = vld [vmem:[#allocation7 + $0xc0] sm:$0xff]
    %v1947 = vld [vmem:[#allocation7 + $0xc8] sm:$0xff]
    %v1948 = vld [vmem:[#allocation7 + $0xd0] sm:$0xff]
    %v1949 = vld [vmem:[#allocation7 + $0xd8] sm:$0xff]
    %v1950 = vld [vmem:[#allocation7 + $0xe0] sm:$0xff]
    %v1951 = vld [vmem:[#allocation7 + $0xe8] sm:$0xff]
    %v1952 = vld [vmem:[#allocation7 + $0xf0] sm:$0xff]
    %v1953 = vld [vmem:[#allocation7 + $0xf8] sm:$0xff]
    %v1954 = vld [vmem:[#allocation7 + $0x100] sm:$0xff]
    %v1955 = vld [vmem:[#allocation7 + $0x108] sm:$0xff]
    %v1956 = vld [vmem:[#allocation7 + $0x110] sm:$0xff]
    %v1957 = vld [vmem:[#allocation7 + $0x118] sm:$0xff]
    %v1958 = vld [vmem:[#allocation7 + $0x120] sm:$0xff]
    %v1959 = vld [vmem:[#allocation7 + $0x128] sm:$0xff]
    %v1960 = vld [vmem:[#allocation7 + $0x130] sm:$0xff]
    %v1961 = vld [vmem:[#allocation7 + $0x138] sm:$0xff]
    %v1962 = vld [vmem:[#allocation7 + $0x140] sm:$0xff]
    %v1963 = vld [vmem:[#allocation7 + $0x148] sm:$0xff]
    %v1964 = vld [vmem:[#allocation7 + $0x150] sm:$0xff]
    %v1965 = vld [vmem:[#allocation7 + $0x158] sm:$0xff]
    %v1966 = vld [vmem:[#allocation7 + $0x160] sm:$0xff]
    %v1967 = vld [vmem:[#allocation7 + $0x168] sm:$0xff]
    %v1968 = vld [vmem:[#allocation7 + $0x170] sm:$0xff]
    %v1969 = vld [vmem:[#allocation7 + $0x178] sm:$0xff]
    %v1970 = vld [vmem:[#allocation7 + $0x180] sm:$0xff]
    %v1971 = vld [vmem:[#allocation7 + $0x188] sm:$0xff]
    %v1972 = vld [vmem:[#allocation7 + $0x190] sm:$0xff]
    %v1973 = vld [vmem:[#allocation7 + $0x198] sm:$0xff]
    %v1974 = vld [vmem:[#allocation7 + $0x1a0] sm:$0xff]
    %v1975 = vld [vmem:[#allocation7 + $0x1a8] sm:$0xff]
    %v1976 = vld [vmem:[#allocation7 + $0x1b0] sm:$0xff]
    %v1977 = vld [vmem:[#allocation7 + $0x1b8] sm:$0xff]
    %v1978 = vld [vmem:[#allocation7 + $0x1c0] sm:$0xff]
    %v1979 = vld [vmem:[#allocation7 + $0x1c8] sm:$0xff]
    %v1980 = vld [vmem:[#allocation7 + $0x1d0] sm:$0xff]
    %v1981 = vld [vmem:[#allocation7 + $0x1d8] sm:$0xff]
    %v1982 = vld [vmem:[#allocation7 + $0x1e0] sm:$0xff]
    %v1983 = vld [vmem:[#allocation7 + $0x1e8] sm:$0xff]
    %v1984 = vld [vmem:[#allocation7 + $0x1f0] sm:$0xff]
    %v1985 = vld [vmem:[#allocation7 + $0x1f8] sm:$0xff]
    %v1986 = vld [vmem:[%s4] sm:$0x3]
    %v1988 = vlaneseq
    %v1989 = vshrl.u32 %v1988, 7
    %v1990 = vsub.s32 0, %v1989
    %v1991 = vrot.slane %v1986, %v1990
    %v1992 = vlaneseq
    %v1993 = vshrl.u32 %v1992, 7
    %v1994 = vsub.s32 1, %v1993
    %v1995 = vrot.slane %v1986, %v1994
    %v2062 = vunpack.c.l.b16 %v1922
    %v2063 = vunpack.c.h.b16 %v1922
    %v2064 = vunpack.c.l.b16 %v1923
    %v2065 = vunpack.c.h.b16 %v1923
    %v2066 = vunpack.c.l.b16 %v1924
    %v2067 = vunpack.c.h.b16 %v1924
    %v2068 = vunpack.c.l.b16 %v1925
    %v2069 = vunpack.c.h.b16 %v1925
    %v2070 = vunpack.c.l.b16 %v1926
    %v2071 = vunpack.c.h.b16 %v1926
    %v2072 = vunpack.c.l.b16 %v1927
    %v2073 = vunpack.c.h.b16 %v1927
    %v2074 = vunpack.c.l.b16 %v1928
    %v2075 = vunpack.c.h.b16 %v1928
    %v2076 = vunpack.c.l.b16 %v1929
    %v2077 = vunpack.c.h.b16 %v1929
    %v2078 = vunpack.c.l.b16 %v1930
    %v2079 = vunpack.c.h.b16 %v1930
    %v2080 = vunpack.c.l.b16 %v1931
    %v2081 = vunpack.c.h.b16 %v1931
    %v2082 = vunpack.c.l.b16 %v1932
    %v2083 = vunpack.c.h.b16 %v1932
    %v2084 = vunpack.c.l.b16 %v1933
    %v2085 = vunpack.c.h.b16 %v1933
    %v2086 = vunpack.c.l.b16 %v1934
    %v2087 = vunpack.c.h.b16 %v1934
    %v2088 = vunpack.c.l.b16 %v1935
    %v2089 = vunpack.c.h.b16 %v1935
    %v2090 = vunpack.c.l.b16 %v1936
    %v2091 = vunpack.c.h.b16 %v1936
    %v2092 = vunpack.c.l.b16 %v1937
    %v2093 = vunpack.c.h.b16 %v1937
    %v2094 = vunpack.c.l.b16 %v1938
    %v2095 = vunpack.c.h.b16 %v1938
    %v2096 = vunpack.c.l.b16 %v1939
    %v2097 = vunpack.c.h.b16 %v1939
    %v2098 = vunpack.c.l.b16 %v1940
    %v2099 = vunpack.c.h.b16 %v1940
    %v2100 = vunpack.c.l.b16 %v1941
    %v2101 = vunpack.c.h.b16 %v1941
    %v2102 = vunpack.c.l.b16 %v1942
    %v2103 = vunpack.c.h.b16 %v1942
    %v2104 = vunpack.c.l.b16 %v1943
    %v2105 = vunpack.c.h.b16 %v1943
    %v2106 = vunpack.c.l.b16 %v1944
    %v2107 = vunpack.c.h.b16 %v1944
    %v2108 = vunpack.c.l.b16 %v1945
    %v2109 = vunpack.c.h.b16 %v1945
    %v2110 = vunpack.c.l.b16 %v1946
    %v2111 = vunpack.c.h.b16 %v1946
    %v2112 = vunpack.c.l.b16 %v1947
    %v2113 = vunpack.c.h.b16 %v1947
    %v2114 = vunpack.c.l.b16 %v1948
    %v2115 = vunpack.c.h.b16 %v1948
    %v2116 = vunpack.c.l.b16 %v1949
    %v2117 = vunpack.c.h.b16 %v1949
    %v2118 = vunpack.c.l.b16 %v1950
    %v2119 = vunpack.c.h.b16 %v1950
    %v2120 = vunpack.c.l.b16 %v1951
    %v2121 = vunpack.c.h.b16 %v1951
    %v2122 = vunpack.c.l.b16 %v1952
    %v2123 = vunpack.c.h.b16 %v1952
    %v2124 = vunpack.c.l.b16 %v1953
    %v2125 = vunpack.c.h.b16 %v1953
    %v2126 = vunpack.c.l.b16 %v1954
    %v2127 = vunpack.c.h.b16 %v1954
    %v2128 = vunpack.c.l.b16 %v1955
    %v2129 = vunpack.c.h.b16 %v1955
    %v2130 = vunpack.c.l.b16 %v1956
    %v2131 = vunpack.c.h.b16 %v1956
    %v2132 = vunpack.c.l.b16 %v1957
    %v2133 = vunpack.c.h.b16 %v1957
    %v2134 = vunpack.c.l.b16 %v1958
    %v2135 = vunpack.c.h.b16 %v1958
    %v2136 = vunpack.c.l.b16 %v1959
    %v2137 = vunpack.c.h.b16 %v1959
    %v2138 = vunpack.c.l.b16 %v1960
    %v2139 = vunpack.c.h.b16 %v1960
    %v2140 = vunpack.c.l.b16 %v1961
    %v2141 = vunpack.c.h.b16 %v1961
    %v2142 = vunpack.c.l.b16 %v1962
    %v2143 = vunpack.c.h.b16 %v1962
    %v2144 = vunpack.c.l.b16 %v1963
    %v2145 = vunpack.c.h.b16 %v1963
    %v2146 = vunpack.c.l.b16 %v1964
    %v2147 = vunpack.c.h.b16 %v1964
    %v2148 = vunpack.c.l.b16 %v1965
    %v2149 = vunpack.c.h.b16 %v1965
    %v2150 = vunpack.c.l.b16 %v1966
    %v2151 = vunpack.c.h.b16 %v1966
    %v2152 = vunpack.c.l.b16 %v1967
    %v2153 = vunpack.c.h.b16 %v1967
    %v2154 = vunpack.c.l.b16 %v1968
    %v2155 = vunpack.c.h.b16 %v1968
    %v2156 = vunpack.c.l.b16 %v1969
    %v2157 = vunpack.c.h.b16 %v1969
    %v2158 = vunpack.c.l.b16 %v1970
    %v2159 = vunpack.c.h.b16 %v1970
    %v2160 = vunpack.c.l.b16 %v1971
    %v2161 = vunpack.c.h.b16 %v1971
    %v2162 = vunpack.c.l.b16 %v1972
    %v2163 = vunpack.c.h.b16 %v1972
    %v2164 = vunpack.c.l.b16 %v1973
    %v2165 = vunpack.c.h.b16 %v1973
    %v2166 = vunpack.c.l.b16 %v1974
    %v2167 = vunpack.c.h.b16 %v1974
    %v2168 = vunpack.c.l.b16 %v1975
    %v2169 = vunpack.c.h.b16 %v1975
    %v2170 = vunpack.c.l.b16 %v1976
    %v2171 = vunpack.c.h.b16 %v1976
    %v2172 = vunpack.c.l.b16 %v1977
    %v2173 = vunpack.c.h.b16 %v1977
    %v2174 = vunpack.c.l.b16 %v1978
    %v2175 = vunpack.c.h.b16 %v1978
    %v2176 = vunpack.c.l.b16 %v1979
    %v2177 = vunpack.c.h.b16 %v1979
    %v2178 = vunpack.c.l.b16 %v1980
    %v2179 = vunpack.c.h.b16 %v1980
    %v2180 = vunpack.c.l.b16 %v1981
    %v2181 = vunpack.c.h.b16 %v1981
    %v2182 = vunpack.c.l.b16 %v1982
    %v2183 = vunpack.c.h.b16 %v1982
    %v2184 = vunpack.c.l.b16 %v1983
    %v2185 = vunpack.c.h.b16 %v1983
    %v2186 = vunpack.c.l.b16 %v1984
    %v2187 = vunpack.c.h.b16 %v1984
    %v2188 = vunpack.c.l.b16 %v1985
    %v2189 = vunpack.c.h.b16 %v1985
    %v2190 = vpack.c.b16 %v2064, %v2062
    %v2191 = vpack.c.b16 %v2065, %v2063
    %v2192 = vpack.c.b16 %v2068, %v2066
    %v2193 = vpack.c.b16 %v2069, %v2067
    %v2194 = vpack.c.b16 %v2072, %v2070
    %v2195 = vpack.c.b16 %v2073, %v2071
    %v2196 = vpack.c.b16 %v2076, %v2074
    %v2197 = vpack.c.b16 %v2077, %v2075
    %v2198 = vpack.c.b16 %v2080, %v2078
    %v2199 = vpack.c.b16 %v2081, %v2079
    %v2200 = vpack.c.b16 %v2084, %v2082
    %v2201 = vpack.c.b16 %v2085, %v2083
    %v2202 = vpack.c.b16 %v2088, %v2086
    %v2203 = vpack.c.b16 %v2089, %v2087
    %v2204 = vpack.c.b16 %v2092, %v2090
    %v2205 = vpack.c.b16 %v2093, %v2091
    %v2206 = vpack.c.b16 %v2096, %v2094
    %v2207 = vpack.c.b16 %v2097, %v2095
    %v2208 = vpack.c.b16 %v2100, %v2098
    %v2209 = vpack.c.b16 %v2101, %v2099
    %v2210 = vpack.c.b16 %v2104, %v2102
    %v2211 = vpack.c.b16 %v2105, %v2103
    %v2212 = vpack.c.b16 %v2108, %v2106
    %v2213 = vpack.c.b16 %v2109, %v2107
    %v2214 = vpack.c.b16 %v2112, %v2110
    %v2215 = vpack.c.b16 %v2113, %v2111
    %v2216 = vpack.c.b16 %v2116, %v2114
    %v2217 = vpack.c.b16 %v2117, %v2115
    %v2218 = vpack.c.b16 %v2120, %v2118
    %v2219 = vpack.c.b16 %v2121, %v2119
    %v2220 = vpack.c.b16 %v2124, %v2122
    %v2221 = vpack.c.b16 %v2125, %v2123
    %v2222 = vpack.c.b16 %v2128, %v2126
    %v2223 = vpack.c.b16 %v2129, %v2127
    %v2224 = vpack.c.b16 %v2132, %v2130
    %v2225 = vpack.c.b16 %v2133, %v2131
    %v2226 = vpack.c.b16 %v2136, %v2134
    %v2227 = vpack.c.b16 %v2137, %v2135
    %v2228 = vpack.c.b16 %v2140, %v2138
    %v2229 = vpack.c.b16 %v2141, %v2139
    %v2230 = vpack.c.b16 %v2144, %v2142
    %v2231 = vpack.c.b16 %v2145, %v2143
    %v2232 = vpack.c.b16 %v2148, %v2146
    %v2233 = vpack.c.b16 %v2149, %v2147
    %v2234 = vpack.c.b16 %v2152, %v2150
    %v2235 = vpack.c.b16 %v2153, %v2151
    %v2236 = vpack.c.b16 %v2156, %v2154
    %v2237 = vpack.c.b16 %v2157, %v2155
    %v2238 = vpack.c.b16 %v2160, %v2158
    %v2239 = vpack.c.b16 %v2161, %v2159
    %v2240 = vpack.c.b16 %v2164, %v2162
    %v2241 = vpack.c.b16 %v2165, %v2163
    %v2242 = vpack.c.b16 %v2168, %v2166
    %v2243 = vpack.c.b16 %v2169, %v2167
    %v2244 = vpack.c.b16 %v2172, %v2170
    %v2245 = vpack.c.b16 %v2173, %v2171
    %v2246 = vpack.c.b16 %v2176, %v2174
    %v2247 = vpack.c.b16 %v2177, %v2175
    %v2248 = vpack.c.b16 %v2180, %v2178
    %v2249 = vpack.c.b16 %v2181, %v2179
    %v2250 = vpack.c.b16 %v2184, %v2182
    %v2251 = vpack.c.b16 %v2185, %v2183
    %v2252 = vpack.c.b16 %v2188, %v2186
    %v2253 = vpack.c.b16 %v2189, %v2187
    %2318 = vmatprep.subr.bf16.mxu0 %v2191
    %2319 = vmatpush1.bf16.msra.mxu0 %v2190
    %2320 = vmatprep.subr.bf16.mxu0 %v2193
    %2321 = vmatpush1.bf16.msra.mxu0 %v2192
    %2322 = vmatprep.subr.bf16.mxu0 %v2195
    %2323 = vmatpush1.bf16.msra.mxu0 %v2194
    %2324 = vmatprep.subr.bf16.mxu0 %v2197
    %2325 = vmatpush1.bf16.msra.mxu0 %v2196
    %2326 = vmatprep.subr.bf16.mxu0 %v2199
    %2327 = vmatpush1.bf16.msra.mxu0 %v2198
    %2328 = vmatprep.subr.bf16.mxu0 %v2201
    %2329 = vmatpush1.bf16.msra.mxu0 %v2200
    %2330 = vmatprep.subr.bf16.mxu0 %v2203
    %2331 = vmatpush1.bf16.msra.mxu0 %v2202
    %2332 = vmatprep.subr.bf16.mxu0 %v2205
    %2333 = vmatpush1.bf16.msra.mxu0 %v2204
    %2334 = vmatprep.subr.bf16.mxu0 %v2207
    %2335 = vmatpush1.bf16.msra.mxu0 %v2206
    %2336 = vmatprep.subr.bf16.mxu0 %v2209
    %2337 = vmatpush1.bf16.msra.mxu0 %v2208
    %2338 = vmatprep.subr.bf16.mxu0 %v2211
    %2339 = vmatpush1.bf16.msra.mxu0 %v2210
    %2340 = vmatprep.subr.bf16.mxu0 %v2213
    %2341 = vmatpush1.bf16.msra.mxu0 %v2212
    %2342 = vmatprep.subr.bf16.mxu0 %v2215
    %2343 = vmatpush1.bf16.msra.mxu0 %v2214
    %2344 = vmatprep.subr.bf16.mxu0 %v2217
    %2345 = vmatpush1.bf16.msra.mxu0 %v2216
    %2346 = vmatprep.subr.bf16.mxu0 %v2219
    %2347 = vmatpush1.bf16.msra.mxu0 %v2218
    %2348 = vmatprep.subr.bf16.mxu0 %v2221
    %2349 = vmatpush1.bf16.msra.mxu0 %v2220
    %2350 = vmatprep.mubr.bf16.mxu0 %v1919
    %2351 = vmatmul.mubr.bf16.gmra.mrb[0].mxu0 %v1918
    %v2352 = vpop.f32.mrb[0].mxu0
    %v2353 = vadd.f32 %v1991, %v2352
    %v2354 = vpop.f32.mrb[0].mxu0
    %v2355 = vadd.f32 %v1995, %v2354
    %v2356 = vpop.f32.mrb[0].mxu0
    %v2357 = vadd.f32 %v1991, %v2356
    %v2358 = vpop.f32.mrb[0].mxu0
    %v2359 = vadd.f32 %v1995, %v2358
    %2360 = vdwg.mxu0
    %2361 = vmatprep.subr.bf16.mxu0 %v2223
    %2362 = vmatpush1.bf16.msra.mxu0 %v2222
    %2363 = vmatprep.subr.bf16.mxu0 %v2225
    %2364 = vmatpush1.bf16.msra.mxu0 %v2224
    %2365 = vmatprep.subr.bf16.mxu0 %v2227
    %2366 = vmatpush1.bf16.msra.mxu0 %v2226
    %2367 = vmatprep.subr.bf16.mxu0 %v2229
    %2368 = vmatpush1.bf16.msra.mxu0 %v2228
    %2369 = vmatprep.subr.bf16.mxu0 %v2231
    %2370 = vmatpush1.bf16.msra.mxu0 %v2230
    %2371 = vmatprep.subr.bf16.mxu0 %v2233
    %2372 = vmatpush1.bf16.msra.mxu0 %v2232
    %2373 = vmatprep.subr.bf16.mxu0 %v2235
    %2374 = vmatpush1.bf16.msra.mxu0 %v2234
    %2375 = vmatprep.subr.bf16.mxu0 %v2237
    %2376 = vmatpush1.bf16.msra.mxu0 %v2236
    %2377 = vmatprep.subr.bf16.mxu0 %v2239
    %2378 = vmatpush1.bf16.msra.mxu0 %v2238
    %2379 = vmatprep.subr.bf16.mxu0 %v2241
    %2380 = vmatpush1.bf16.msra.mxu0 %v2240
    %2381 = vmatprep.subr.bf16.mxu0 %v2243
    %2382 = vmatpush1.bf16.msra.mxu0 %v2242
    %2383 = vmatprep.subr.bf16.mxu0 %v2245
    %2384 = vmatpush1.bf16.msra.mxu0 %v2244
    %2385 = vmatprep.subr.bf16.mxu0 %v2247
    %2386 = vmatpush1.bf16.msra.mxu0 %v2246
    %2387 = vmatprep.subr.bf16.mxu0 %v2249
    %2388 = vmatpush1.bf16.msra.mxu0 %v2248
    %2389 = vmatprep.subr.bf16.mxu0 %v2251
    %2390 = vmatpush1.bf16.msra.mxu0 %v2250
    %2391 = vmatprep.subr.bf16.mxu0 %v2253
    %2392 = vmatpush1.bf16.msra.mxu0 %v2252
    %2393 = vmatprep.mubr.bf16.mxu0 %v1921
    %2394 = vmatmul.mubr.bf16.gmra.mrb[0].mxu0 %v1920
    %v2395 = vpop.f32.mrb[0].mxu0
    %v2396 = vadd.f32 %v2353, %v2395
    %v2397 = vpop.f32.mrb[0].mxu0
    %v2398 = vadd.f32 %v2355, %v2397
    %v2399 = vpop.f32.mrb[0].mxu0
    %v2400 = vadd.f32 %v2357, %v2399
    %v2401 = vpop.f32.mrb[0].mxu0
    %v2402 = vadd.f32 %v2359, %v2401
    %2403 = vdwg.mxu0
    %v2404 = vpack.c.bf16 %v2400, %v2396
    %v2405 = vpack.c.bf16 %v2402, %v2398
    %v2406 = vmul.bf16 %v2404, 1056980736
    %v2407 = vmul.bf16 %v2405, 1056980736
    %v2408 = vmul.bf16 %v2404, 1060454197
    %v2409 = vmul.bf16 %v2405, 1060454197
    %v2410 = verf.bf16.pop %v2408
    %v2411 = verf.bf16.pop %v2409
    %v2412 = vadd.bf16 %v2410, 1065369472
    %v2413 = vadd.bf16 %v2411, 1065369472
    %v2414 = vmul.bf16 %v2406, %v2412
    %v2415 = vmul.bf16 %v2407, %v2413
    %v2416 = vld [vmem:[#allocation8] sm:$0xf]
    %v2417 = vld [vmem:[#allocation8 + $0x4] sm:$0xf]
    %v2418 = vld [vmem:[#allocation8 + $0x8] sm:$0xf]
    %v2419 = vld [vmem:[#allocation8 + $0xc] sm:$0xf]
    %v2420 = vld [vmem:[#allocation8 + $0x10] sm:$0xf]
    %v2421 = vld [vmem:[#allocation8 + $0x14] sm:$0xf]
    %v2422 = vld [vmem:[#allocation8 + $0x18] sm:$0xf]
    %v2423 = vld [vmem:[#allocation8 + $0x1c] sm:$0xf]
    %v2424 = vld [vmem:[#allocation8 + $0x20] sm:$0xf]
    %v2425 = vld [vmem:[#allocation8 + $0x24] sm:$0xf]
    %v2426 = vld [vmem:[#allocation8 + $0x28] sm:$0xf]
    %v2427 = vld [vmem:[#allocation8 + $0x2c] sm:$0xf]
    %v2428 = vld [vmem:[#allocation8 + $0x30] sm:$0xf]
    %v2429 = vld [vmem:[#allocation8 + $0x34] sm:$0xf]
    %v2430 = vld [vmem:[#allocation8 + $0x38] sm:$0xf]
    %v2431 = vld [vmem:[#allocation8 + $0x3c] sm:$0xf]
    %v2432 = vld [vmem:[#allocation8 + $0x40] sm:$0xf]
    %v2433 = vld [vmem:[#allocation8 + $0x44] sm:$0xf]
    %v2434 = vld [vmem:[#allocation8 + $0x48] sm:$0xf]
    %v2435 = vld [vmem:[#allocation8 + $0x4c] sm:$0xf]
    %v2436 = vld [vmem:[#allocation8 + $0x50] sm:$0xf]
    %v2437 = vld [vmem:[#allocation8 + $0x54] sm:$0xf]
    %v2438 = vld [vmem:[#allocation8 + $0x58] sm:$0xf]
    %v2439 = vld [vmem:[#allocation8 + $0x5c] sm:$0xf]
    %v2440 = vld [vmem:[#allocation8 + $0x60] sm:$0xf]
    %v2441 = vld [vmem:[#allocation8 + $0x64] sm:$0xf]
    %v2442 = vld [vmem:[#allocation8 + $0x68] sm:$0xf]
    %v2443 = vld [vmem:[#allocation8 + $0x6c] sm:$0xf]
    %v2444 = vld [vmem:[#allocation8 + $0x70] sm:$0xf]
    %v2445 = vld [vmem:[#allocation8 + $0x74] sm:$0xf]
    %v2446 = vld [vmem:[#allocation8 + $0x78] sm:$0xf]
    %v2447 = vld [vmem:[#allocation8 + $0x7c] sm:$0xf]
    %v2448 = vld [vmem:[%s6] sm:$0x1]
    %v2450 = vlaneseq
    %v2451 = vshrl.u32 %v2450, 7
    %v2452 = vsub.s32 0, %v2451
    %v2453 = vrot.slane %v2448, %v2452
    %v2487 = vunpack.c.l.b16 %v2416
    %v2488 = vunpack.c.l.b16 %v2417
    %v2489 = vunpack.c.l.b16 %v2418
    %v2490 = vunpack.c.l.b16 %v2419
    %v2491 = vunpack.c.l.b16 %v2420
    %v2492 = vunpack.c.l.b16 %v2421
    %v2493 = vunpack.c.l.b16 %v2422
    %v2494 = vunpack.c.l.b16 %v2423
    %v2495 = vunpack.c.l.b16 %v2424
    %v2496 = vunpack.c.l.b16 %v2425
    %v2497 = vunpack.c.l.b16 %v2426
    %v2498 = vunpack.c.l.b16 %v2427
    %v2499 = vunpack.c.l.b16 %v2428
    %v2500 = vunpack.c.l.b16 %v2429
    %v2501 = vunpack.c.l.b16 %v2430
    %v2502 = vunpack.c.l.b16 %v2431
    %v2503 = vunpack.c.l.b16 %v2432
    %v2504 = vunpack.c.l.b16 %v2433
    %v2505 = vunpack.c.l.b16 %v2434
    %v2506 = vunpack.c.l.b16 %v2435
    %v2507 = vunpack.c.l.b16 %v2436
    %v2508 = vunpack.c.l.b16 %v2437
    %v2509 = vunpack.c.l.b16 %v2438
    %v2510 = vunpack.c.l.b16 %v2439
    %v2511 = vunpack.c.l.b16 %v2440
    %v2512 = vunpack.c.l.b16 %v2441
    %v2513 = vunpack.c.l.b16 %v2442
    %v2514 = vunpack.c.l.b16 %v2443
    %v2515 = vunpack.c.l.b16 %v2444
    %v2516 = vunpack.c.l.b16 %v2445
    %v2517 = vunpack.c.l.b16 %v2446
    %v2518 = vunpack.c.l.b16 %v2447
    %v2519 = vpack.c.b16 %v2488, %v2487
    %v2520 = vpack.c.b16 %v2490, %v2489
    %v2521 = vpack.c.b16 %v2492, %v2491
    %v2522 = vpack.c.b16 %v2494, %v2493
    %v2523 = vpack.c.b16 %v2496, %v2495
    %v2524 = vpack.c.b16 %v2498, %v2497
    %v2525 = vpack.c.b16 %v2500, %v2499
    %v2526 = vpack.c.b16 %v2502, %v2501
    %v2527 = vpack.c.b16 %v2504, %v2503
    %v2528 = vpack.c.b16 %v2506, %v2505
    %v2529 = vpack.c.b16 %v2508, %v2507
    %v2530 = vpack.c.b16 %v2510, %v2509
    %v2531 = vpack.c.b16 %v2512, %v2511
    %v2532 = vpack.c.b16 %v2514, %v2513
    %v2533 = vpack.c.b16 %v2516, %v2515
    %v2534 = vpack.c.b16 %v2518, %v2517
    %2551 = vmatprep.subr.bf16.mxu0 0
    %2552 = vmatpush1.bf16.msra.mxu0 %v2519
    %2553 = vmatprep.subr.bf16.mxu0 0
    %2554 = vmatpush1.bf16.msra.mxu0 %v2520
    %2555 = vmatprep.subr.bf16.mxu0 0
    %2556 = vmatpush1.bf16.msra.mxu0 %v2521
    %2557 = vmatprep.subr.bf16.mxu0 0
    %2558 = vmatpush1.bf16.msra.mxu0 %v2522
    %2559 = vmatprep.subr.bf16.mxu0 0
    %2560 = vmatpush1.bf16.msra.mxu0 %v2523
    %2561 = vmatprep.subr.bf16.mxu0 0
    %2562 = vmatpush1.bf16.msra.mxu0 %v2524
    %2563 = vmatprep.subr.bf16.mxu0 0
    %2564 = vmatpush1.bf16.msra.mxu0 %v2525
    %2565 = vmatprep.subr.bf16.mxu0 0
    %2566 = vmatpush1.bf16.msra.mxu0 %v2526
    %2567 = vmatprep.subr.bf16.mxu0 0
    %2568 = vmatpush1.bf16.msra.mxu0 %v2527
    %2569 = vmatprep.subr.bf16.mxu0 0
    %2570 = vmatpush1.bf16.msra.mxu0 %v2528
    %2571 = vmatprep.subr.bf16.mxu0 0
    %2572 = vmatpush1.bf16.msra.mxu0 %v2529
    %2573 = vmatprep.subr.bf16.mxu0 0
    %2574 = vmatpush1.bf16.msra.mxu0 %v2530
    %2575 = vmatprep.subr.bf16.mxu0 0
    %2576 = vmatpush1.bf16.msra.mxu0 %v2531
    %2577 = vmatprep.subr.bf16.mxu0 0
    %2578 = vmatpush1.bf16.msra.mxu0 %v2532
    %2579 = vmatprep.subr.bf16.mxu0 0
    %2580 = vmatpush1.bf16.msra.mxu0 %v2533
    %2581 = vmatprep.subr.bf16.mxu0 0
    %2582 = vmatpush1.bf16.msra.mxu0 %v2534
    %2583 = vmatprep.mubr.bf16.mxu0 %v2415
    %2584 = vmatmul.mubr.bf16.gmra.mrb[0].mxu0 %v2414
    %v2585 = vpop.f32.mrb[0].mxu0
    %v2586 = vadd.f32 %v2453, %v2585
    %v2587 = vpop.f32.mrb[0].mxu0
    %v2588 = vpop.f32.mrb[0].mxu0
    %v2589 = vadd.f32 %v2453, %v2588
    %v2590 = vpop.f32.mrb[0].mxu0
    %2591 = vdwg.mxu0
    %v2592 = vpack.c.bf16 %v2589, %v2586
    %v2593 = vmul.bf16 %v2592, 1056980736
    %v2594 = vmul.bf16 %v2592, 1060454197
    %v2595 = verf.bf16.pop %v2594
    %v2596 = vadd.bf16 %v2595, 1065369472
    %v2597 = vmul.bf16 %v2593, %v2596
    %v2598 = vld [vmem:[#allocation10] sm:$0xf]
    %v2599 = vld [vmem:[#allocation10 + $0x4] sm:$0xf]
    %v2600 = vld [vmem:[#allocation10 + $0x8] sm:$0xf]
    %v2601 = vld [vmem:[#allocation10 + $0xc] sm:$0xf]
    %v2602 = vld [vmem:[#allocation10 + $0x10] sm:$0xf]
    %v2603 = vld [vmem:[#allocation10 + $0x14] sm:$0xf]
    %v2604 = vld [vmem:[#allocation10 + $0x18] sm:$0xf]
    %v2605 = vld [vmem:[#allocation10 + $0x1c] sm:$0xf]
    %v2606 = vld [vmem:[#allocation10 + $0x20] sm:$0xf]
    %v2607 = vld [vmem:[#allocation10 + $0x24] sm:$0xf]
    %v2608 = vld [vmem:[#allocation10 + $0x28] sm:$0xf]
    %v2609 = vld [vmem:[#allocation10 + $0x2c] sm:$0xf]
    %v2610 = vld [vmem:[#allocation10 + $0x30] sm:$0xf]
    %v2611 = vld [vmem:[#allocation10 + $0x34] sm:$0xf]
    %v2612 = vld [vmem:[#allocation10 + $0x38] sm:$0xf]
    %v2613 = vld [vmem:[#allocation10 + $0x3c] sm:$0xf]
    %v2614 = vld [vmem:[%s8] sm:$0x1]
    %v2616 = vlaneseq
    %v2617 = vshrl.u32 %v2616, 7
    %v2618 = vsub.s32 0, %v2617
    %v2619 = vrot.slane %v2614, %v2618
    %v2637 = vunpack.c.l.b16 %v2598
    %v2638 = vunpack.c.l.b16 %v2599
    %v2639 = vunpack.c.l.b16 %v2600
    %v2640 = vunpack.c.l.b16 %v2601
    %v2641 = vunpack.c.l.b16 %v2602
    %v2642 = vunpack.c.l.b16 %v2603
    %v2643 = vunpack.c.l.b16 %v2604
    %v2644 = vunpack.c.l.b16 %v2605
    %v2645 = vunpack.c.l.b16 %v2606
    %v2646 = vunpack.c.l.b16 %v2607
    %v2647 = vunpack.c.l.b16 %v2608
    %v2648 = vunpack.c.l.b16 %v2609
    %v2649 = vunpack.c.l.b16 %v2610
    %v2650 = vunpack.c.l.b16 %v2611
    %v2651 = vunpack.c.l.b16 %v2612
    %v2652 = vunpack.c.l.b16 %v2613
    %v2653 = vpack.c.b16 %v2638, %v2637
    %v2654 = vpack.c.b16 %v2640, %v2639
    %v2655 = vpack.c.b16 %v2642, %v2641
    %v2656 = vpack.c.b16 %v2644, %v2643
    %v2657 = vpack.c.b16 %v2646, %v2645
    %v2658 = vpack.c.b16 %v2648, %v2647
    %v2659 = vpack.c.b16 %v2650, %v2649
    %v2660 = vpack.c.b16 %v2652, %v2651
    %2669 = vmatprep.subr.bf16.mxu0 0
    %2670 = vmatpush1.bf16.msra.mxu0 %v2653
    %2671 = vmatprep.subr.bf16.mxu0 0
    %2672 = vmatpush1.bf16.msra.mxu0 %v2654
    %2673 = vmatprep.subr.bf16.mxu0 0
    %2674 = vmatpush1.bf16.msra.mxu0 %v2655
    %2675 = vmatprep.subr.bf16.mxu0 0
    %2676 = vmatpush1.bf16.msra.mxu0 %v2656
    %2677 = vmatprep.subr.bf16.mxu0 0
    %2678 = vmatpush1.bf16.msra.mxu0 %v2657
    %2679 = vmatprep.subr.bf16.mxu0 0
    %2680 = vmatpush1.bf16.msra.mxu0 %v2658
    %2681 = vmatprep.subr.bf16.mxu0 0
    %2682 = vmatpush1.bf16.msra.mxu0 %v2659
    %2683 = vmatprep.subr.bf16.mxu0 0
    %2684 = vmatpush1.bf16.msra.mxu0 %v2660
    %2685 = vmatprep.subr.bf16.mxu0 0
    %2686 = vmatpush1.bf16.msra.mxu0 0
    %2687 = vmatprep.subr.bf16.mxu0 0
    %2688 = vmatpush1.bf16.msra.mxu0 0
    %2689 = vmatprep.subr.bf16.mxu0 0
    %2690 = vmatpush1.bf16.msra.mxu0 0
    %2691 = vmatprep.subr.bf16.mxu0 0
    %2692 = vmatpush1.bf16.msra.mxu0 0
    %2693 = vmatprep.subr.bf16.mxu0 0
    %2694 = vmatpush1.bf16.msra.mxu0 0
    %2695 = vmatprep.subr.bf16.mxu0 0
    %2696 = vmatpush1.bf16.msra.mxu0 0
    %2697 = vmatprep.subr.bf16.mxu0 0
    %2698 = vmatpush1.bf16.msra.mxu0 0
    %2699 = vmatprep.subr.bf16.mxu0 0
    %2700 = vmatpush1.bf16.msra.mxu0 0
    %2701 = vmatprep.mubr.bf16.mxu0 0
    %2702 = vmatmul.mubr.bf16.gmra.mrb[0].mxu0 %v2597
    %v2703 = vpop.f32.mrb[0].mxu0
    %v2704 = vadd.f32 %v2619, %v2703
    %v2705 = vpop.f32.mrb[0].mxu0
    %v2706 = vpop.f32.mrb[0].mxu0
    %v2707 = vadd.f32 %v2619, %v2706
    %v2708 = vpop.f32.mrb[0].mxu0
    %2709 = vdwg.mxu0
    %v2710 = vpack.c.bf16 %v2707, %v2704
    %v2711 = vmul.bf16 %v2710, 1056980736
    %v2712 = vmul.bf16 %v2710, 1060454197
    %v2713 = verf.bf16.pop %v2712
    %v2714 = vadd.bf16 %v2713, 1065369472
    %v2715 = vmul.bf16 %v2711, %v2714
    %v2716 = vld [vmem:[#allocation11] sm:$0xf]
    %v2717 = vld [vmem:[#allocation11 + $0x4] sm:$0xf]
    %v2718 = vld [vmem:[#allocation11 + $0x8] sm:$0xf]
    %v2719 = vld [vmem:[#allocation11 + $0xc] sm:$0xf]
    %v2720 = vld [vmem:[#allocation11 + $0x10] sm:$0xf]
    %v2721 = vld [vmem:[#allocation11 + $0x14] sm:$0xf]
    %v2722 = vld [vmem:[#allocation11 + $0x18] sm:$0xf]
    %v2723 = vld [vmem:[#allocation11 + $0x1c] sm:$0xf]
    %v2724 = vld [vmem:[#allocation11 + $0x20] sm:$0xf]
    %v2725 = vld [vmem:[#allocation11 + $0x24] sm:$0xf]
    %v2726 = vld [vmem:[#allocation11 + $0x28] sm:$0xf]
    %v2727 = vld [vmem:[#allocation11 + $0x2c] sm:$0xf]
    %v2728 = vld [vmem:[#allocation11 + $0x30] sm:$0xf]
    %v2729 = vld [vmem:[#allocation11 + $0x34] sm:$0xf]
    %v2730 = vld [vmem:[#allocation11 + $0x38] sm:$0xf]
    %v2731 = vld [vmem:[#allocation11 + $0x3c] sm:$0xf]
    %v2732 = vld [vmem:[%s10] sm:$0x1]
    %v2734 = vlaneseq
    %v2735 = vshrl.u32 %v2734, 7
    %v2736 = vsub.s32 0, %v2735
    %v2737 = vrot.slane %v2732, %v2736
    %v2755 = vunpack.c.l.b16 %v2716
    %v2756 = vunpack.c.l.b16 %v2717
    %v2757 = vunpack.c.l.b16 %v2718
    %v2758 = vunpack.c.l.b16 %v2719
    %v2759 = vunpack.c.l.b16 %v2720
    %v2760 = vunpack.c.l.b16 %v2721
    %v2761 = vunpack.c.l.b16 %v2722
    %v2762 = vunpack.c.l.b16 %v2723
    %v2763 = vunpack.c.l.b16 %v2724
    %v2764 = vunpack.c.l.b16 %v2725
    %v2765 = vunpack.c.l.b16 %v2726
    %v2766 = vunpack.c.l.b16 %v2727
    %v2767 = vunpack.c.l.b16 %v2728
    %v2768 = vunpack.c.l.b16 %v2729
    %v2769 = vunpack.c.l.b16 %v2730
    %v2770 = vunpack.c.l.b16 %v2731
    %v2771 = vpack.c.b16 %v2756, %v2755
    %v2772 = vpack.c.b16 %v2758, %v2757
    %v2773 = vpack.c.b16 %v2760, %v2759
    %v2774 = vpack.c.b16 %v2762, %v2761
    %v2775 = vpack.c.b16 %v2764, %v2763
    %v2776 = vpack.c.b16 %v2766, %v2765
    %v2777 = vpack.c.b16 %v2768, %v2767
    %v2778 = vpack.c.b16 %v2770, %v2769
    %2787 = vmatprep.subr.bf16.mxu0 0
    %2788 = vmatpush1.bf16.msra.mxu0 %v2771
    %2789 = vmatprep.subr.bf16.mxu0 0
    %2790 = vmatpush1.bf16.msra.mxu0 %v2772
    %2791 = vmatprep.subr.bf16.mxu0 0
    %2792 = vmatpush1.bf16.msra.mxu0 %v2773
    %2793 = vmatprep.subr.bf16.mxu0 0
    %2794 = vmatpush1.bf16.msra.mxu0 %v2774
    %2795 = vmatprep.subr.bf16.mxu0 0
    %2796 = vmatpush1.bf16.msra.mxu0 %v2775
    %2797 = vmatprep.subr.bf16.mxu0 0
    %2798 = vmatpush1.bf16.msra.mxu0 %v2776
    %2799 = vmatprep.subr.bf16.mxu0 0
    %2800 = vmatpush1.bf16.msra.mxu0 %v2777
    %2801 = vmatprep.subr.bf16.mxu0 0
    %2802 = vmatpush1.bf16.msra.mxu0 %v2778
    %2803 = vmatprep.subr.bf16.mxu0 0
    %2804 = vmatpush1.bf16.msra.mxu0 0
    %2805 = vmatprep.subr.bf16.mxu0 0
    %2806 = vmatpush1.bf16.msra.mxu0 0
    %2807 = vmatprep.subr.bf16.mxu0 0
    %2808 = vmatpush1.bf16.msra.mxu0 0
    %2809 = vmatprep.subr.bf16.mxu0 0
    %2810 = vmatpush1.bf16.msra.mxu0 0
    %2811 = vmatprep.subr.bf16.mxu0 0
    %2812 = vmatpush1.bf16.msra.mxu0 0
    %2813 = vmatprep.subr.bf16.mxu0 0
    %2814 = vmatpush1.bf16.msra.mxu0 0
    %2815 = vmatprep.subr.bf16.mxu0 0
    %2816 = vmatpush1.bf16.msra.mxu0 0
    %2817 = vmatprep.subr.bf16.mxu0 0
    %2818 = vmatpush1.bf16.msra.mxu0 0
    %2819 = vmatprep.mubr.bf16.mxu0 0
    %2820 = vmatmul.mubr.bf16.gmra.mrb[0].mxu0 %v2715
    %v2821 = vpop.f32.mrb[0].mxu0
    %v2822 = vadd.f32 %v2737, %v2821
    %v2823 = vpop.f32.mrb[0].mxu0
    %v2824 = vpop.f32.mrb[0].mxu0
    %v2825 = vadd.f32 %v2737, %v2824
    %v2826 = vpop.f32.mrb[0].mxu0
    %2827 = vdwg.mxu0
    %v2828 = vpack.c.bf16 %v2825, %v2822
    %v2829 = vmul.bf16 %v2828, 1056980736
    %v2830 = vmul.bf16 %v2828, 1060454197
    %v2831 = verf.bf16.pop %v2830
    %v2832 = vadd.bf16 %v2831, 1065369472
    %v2833 = vmul.bf16 %v2829, %v2832
    %v2834 = vld [vmem:[#allocation13] sm:$0xf]
    %v2835 = vld [vmem:[#allocation13 + $0x4] sm:$0xf]
    %v2836 = vld [vmem:[#allocation13 + $0x8] sm:$0xf]
    %v2837 = vld [vmem:[#allocation13 + $0xc] sm:$0xf]
    %v2838 = vld [vmem:[#allocation13 + $0x10] sm:$0xf]
    %v2839 = vld [vmem:[#allocation13 + $0x14] sm:$0xf]
    %v2840 = vld [vmem:[#allocation13 + $0x18] sm:$0xf]
    %v2841 = vld [vmem:[#allocation13 + $0x1c] sm:$0xf]
    %v2842 = vld [vmem:[#allocation13 + $0x20] sm:$0xf]
    %v2843 = vld [vmem:[#allocation13 + $0x24] sm:$0xf]
    %v2844 = vld [vmem:[#allocation13 + $0x28] sm:$0xf]
    %v2845 = vld [vmem:[#allocation13 + $0x2c] sm:$0xf]
    %v2846 = vld [vmem:[#allocation13 + $0x30] sm:$0xf]
    %v2847 = vld [vmem:[#allocation13 + $0x34] sm:$0xf]
    %v2848 = vld [vmem:[#allocation13 + $0x38] sm:$0xf]
    %v2849 = vld [vmem:[#allocation13 + $0x3c] sm:$0xf]
    %v2850 = vld [vmem:[%s12] sm:$0x1]
    %v2852 = vlaneseq
    %v2853 = vshrl.u32 %v2852, 7
    %v2854 = vsub.s32 0, %v2853
    %v2855 = vrot.slane %v2850, %v2854
    %v2873 = vunpack.c.l.b16 %v2834
    %v2874 = vunpack.c.l.b16 %v2835
    %v2875 = vunpack.c.l.b16 %v2836
    %v2876 = vunpack.c.l.b16 %v2837
    %v2877 = vunpack.c.l.b16 %v2838
    %v2878 = vunpack.c.l.b16 %v2839
    %v2879 = vunpack.c.l.b16 %v2840
    %v2880 = vunpack.c.l.b16 %v2841
    %v2881 = vunpack.c.l.b16 %v2842
    %v2882 = vunpack.c.l.b16 %v2843
    %v2883 = vunpack.c.l.b16 %v2844
    %v2884 = vunpack.c.l.b16 %v2845
    %v2885 = vunpack.c.l.b16 %v2846
    %v2886 = vunpack.c.l.b16 %v2847
    %v2887 = vunpack.c.l.b16 %v2848
    %v2888 = vunpack.c.l.b16 %v2849
    %v2889 = vpack.c.b16 %v2874, %v2873
    %v2890 = vpack.c.b16 %v2876, %v2875
    %v2891 = vpack.c.b16 %v2878, %v2877
    %v2892 = vpack.c.b16 %v2880, %v2879
    %v2893 = vpack.c.b16 %v2882, %v2881
    %v2894 = vpack.c.b16 %v2884, %v2883
    %v2895 = vpack.c.b16 %v2886, %v2885
    %v2896 = vpack.c.b16 %v2888, %v2887
    %2905 = vmatprep.subr.bf16.mxu0 0
    %2906 = vmatpush1.bf16.msra.mxu0 %v2889
    %2907 = vmatprep.subr.bf16.mxu0 0
    %2908 = vmatpush1.bf16.msra.mxu0 %v2890
    %2909 = vmatprep.subr.bf16.mxu0 0
    %2910 = vmatpush1.bf16.msra.mxu0 %v2891
    %2911 = vmatprep.subr.bf16.mxu0 0
    %2912 = vmatpush1.bf16.msra.mxu0 %v2892
    %2913 = vmatprep.subr.bf16.mxu0 0
    %2914 = vmatpush1.bf16.msra.mxu0 %v2893
    %2915 = vmatprep.subr.bf16.mxu0 0
    %2916 = vmatpush1.bf16.msra.mxu0 %v2894
    %2917 = vmatprep.subr.bf16.mxu0 0
    %2918 = vmatpush1.bf16.msra.mxu0 %v2895
    %2919 = vmatprep.subr.bf16.mxu0 0
    %2920 = vmatpush1.bf16.msra.mxu0 %v2896
    %2921 = vmatprep.subr.bf16.mxu0 0
    %2922 = vmatpush1.bf16.msra.mxu0 0
    %2923 = vmatprep.subr.bf16.mxu0 0
    %2924 = vmatpush1.bf16.msra.mxu0 0
    %2925 = vmatprep.subr.bf16.mxu0 0
    %2926 = vmatpush1.bf16.msra.mxu0 0
    %2927 = vmatprep.subr.bf16.mxu0 0
    %2928 = vmatpush1.bf16.msra.mxu0 0
    %2929 = vmatprep.subr.bf16.mxu0 0
    %2930 = vmatpush1.bf16.msra.mxu0 0
    %2931 = vmatprep.subr.bf16.mxu0 0
    %2932 = vmatpush1.bf16.msra.mxu0 0
    %2933 = vmatprep.subr.bf16.mxu0 0
    %2934 = vmatpush1.bf16.msra.mxu0 0
    %2935 = vmatprep.subr.bf16.mxu0 0
    %2936 = vmatpush1.bf16.msra.mxu0 0
    %2937 = vmatprep.mubr.bf16.mxu0 0
    %2938 = vmatmul.mubr.bf16.gmra.mrb[0].mxu0 %v2833
    %v2939 = vpop.f32.mrb[0].mxu0
    %v2940 = vadd.f32 %v2855, %v2939
    %v2941 = vpop.f32.mrb[0].mxu0
    %v2942 = vpop.f32.mrb[0].mxu0
    %v2943 = vadd.f32 %v2855, %v2942
    %v2944 = vpop.f32.mrb[0].mxu0
    %2945 = vdwg.mxu0
    %v2946 = vand.u32 2147483647, %v2940
    %v2947 = vand.u32 2147483647, %v2943
    %v2948 = vsub.f32 0.0, %v2946
    %v2949 = vsub.f32 0.0, %v2947
    %v2950 = vmul.f32 %v2948, 1.442695
    %v2951 = vpow.pop %v2950
    %v2952 = vmul.f32 %v2949, 1.442695
    %v2953 = vpow.pop %v2952
    %v2954 = vadd.f32 %v2951, 1.0
    %v2955 = vadd.f32 %v2953, 1.0
    %v2956 = vrcp.pop %v2954
    %v2957 = vrcp.pop %v2955
    %vm2958 = vcmp.ge.f32.partialorder %v2940, 0.0
    %vm2959 = vcmp.ge.f32.partialorder %v2943, 0.0
    %v2960 = vmul.f32 %v2951, %v2956
    %v2961 = vmul.f32 %v2953, %v2957
    %v2962 = vsel %vm2958, %v2956, %v2960
    %v2963 = vsel %vm2959, %v2957, %v2961
    %v2964 = vpack.c.bf16 %v2963, %v2962
    %v2966 = vunpack.c.l.b16 %v2964
    %v2967 = vunpack.c.h.b16 %v2964
    %v2968 = vpack.c.b16 %v2966, %v2966
    %v2969 = vpack.c.b16 %v2967, %v2967
    %2972 = vst [vmem:[#allocation14] sm:$0xf] %v2968
    %2973 = vst [vmem:[#allocation14 + $0x4] sm:$0xf] %v2969
    // Predicated region
    $region82: #{tpu_custom_call.1} parent=1 // pred_check
      _
    $region83: #{tpu_custom_call.1} parent=1 // pred_check_branch
      %2975 = sbr.rel (0) target = $region85
    $region84: #{tpu_custom_call.1} parent=1 // pred_region
      %s2977 = ssub.s32 128, 128
      %2978 = vsyncadd [#allocation4], %s2977
      %s2979 = sshll.u32 [#allocation14], 4
      %s2980 = int_to_ptr.vmem [resolvable:$true] %s2979
      %2985 = dma.vmem_to_hbm [thread:$0]  %s2980, 128, %s13, [#allocation4], 64, 64, 4
    $region85: #{tpu_custom_call.1} parent=1 // pred_fallthru
      _
    // Predicated region
    $region86: #{tpu_custom_call.1} parent=1 // pred_check
      _
    $region87: #{tpu_custom_call.1} parent=1 // pred_check_branch
      %2987 = sbr.rel (0) target = $region89
    $region88: #{tpu_custom_call.1} parent=1 // pred_region
      %2988 = dma.done [#allocation4], 128
    $region89: #{tpu_custom_call.1} parent=1 // pred_fallthru
      _
    %2989 = vsyncpa [#allocation3], 1
    %2990 = vsyncpa [#allocation6], 1
    %2991 = vsyncpa [#allocation9], 1
    %2992 = vsyncpa [#allocation12], 1
    %2993 = vsyncpa [#allocation4], 1

</llo_original>
